<compile_context>
chip_gen: v6e
topology: v6e:2x2x1
jax: 0.10.0
libtpu: 0.0.40
codegen_flags: <defaults>
</compile_context>

<pallas_src>
import functools
import math

import jax
import jax.numpy as jnp
from jax.experimental import pallas as pl
from jax.experimental.pallas import tpu as pltpu


def _round_up(x, m):
    return (x + m - 1) // m * m


def _cdiv(a, b):
    return -(-a // b)


def _choose_tiles(N, tile_n, B):
    tile_n = int(min(_round_up(int(tile_n), 8), _round_up(N, 8)))
    n_tiles = _cdiv(N, tile_n)
    # v7x shards the "parallel" grid axes across its 2 TensorCores; prefer an
    # even total cell count so neither core idles (no effect on v5e/v6e).
    if (B * n_tiles) % 2 == 1 and N > 8:
        t2 = _round_up(_cdiv(N, n_tiles + 1), 8)
        if t2 >= 8:
            nt2 = _cdiv(N, t2)
            if (B * nt2) % 2 == 0:
                tile_n, n_tiles = t2, nt2
    return tile_n, n_tiles


# ----------------------------------------------------------------------------
# Pallas kernel: one (batch, point-tile) per grid step.
# ----------------------------------------------------------------------------
def _velocity_kernel(p_ref,      # (1, TILE_N, out_dim)  compute_dtype
                     pb_ref,     # (1, n_blocks+1, H)    f32  per-batch folded biases
                     wpx_ref,    # (out_dim, H)          compute_dtype
                     w0_ref,     # (n_blocks, H, H)      compute_dtype
                     b0_ref,     # (n_blocks, 1, H)      f32
                     w1_ref,     # (n_blocks, H, H)      compute_dtype
                     wo_ref,     # (H, out_dim)          compute_dtype (sign folded)
                     bo_ref,     # (1, out_dim)          f32           (sign folded)
                     out_ref,    # (1, TILE_N, out_dim)  f32
                     *, n_blocks, out_dim, compute_dtype, fc_p_on_vpu):
    p = p_ref[0]                      # (TILE_N, out_dim)
    bias0 = pb_ref[0, 0:1, :]         # (1, H)  = t*Wp[time] + bp + cz injection[0]

    if fc_p_on_vpu:
        # K = out_dim (3) is tiny: do fc_p as broadcast multiply-adds on the
        # VPU instead of spending MXU pushes (helps on v5e where MXU saturates).
        net = bias0.astype(jnp.float32)
        for k in range(out_dim):
            net = net + (p[:, k:k + 1].astype(jnp.float32)
                         * wpx_ref[k:k + 1, :].astype(jnp.float32))
    else:
        net = jnp.dot(p, wpx_ref[...], preferred_element_type=jnp.float32) + bias0

    def act(x):  # ReLU in f32, cast to MXU operand dtype
        return jnp.maximum(x, 0.0).astype(compute_dtype)

    for i in range(n_blocks):
        # ResnetBlockFC (size_in == size_out -> identity shortcut); the c/z code
        # injection of the *next* block is already folded into pb row i+1.
        h = jnp.dot(act(net), w0_ref[i], preferred_element_type=jnp.float32) + b0_ref[i]
        dx = (jnp.dot(act(h), w1_ref[i], preferred_element_type=jnp.float32)
              + pb_ref[0, i + 1:i + 2, :])
        net = net + dx

    # motion_vectors = sign * fc_out(relu(net))   (sign folded into wo/bo)
    mv = jnp.dot(act(net), wo_ref[...], preferred_element_type=jnp.float32) + bo_ref[...]
    out_ref[0] = mv.astype(out_ref.dtype)


# ----------------------------------------------------------------------------
# Wrapper: disentangle inputs, fold biases, call the kernel, concat output.
# ----------------------------------------------------------------------------
def velocity_field_forward(t, inputs, params, *, in_dim, out_dim, c_dim, z_dim,
                           n_blocks, T_batch=None, invert=False,
                           compute_dtype=jnp.bfloat16, tile_n=2048,
                           fc_p_on_vpu=False):
    # kernel path assumes c_dim > 0 and z_dim > 0 (module defaults are 128/128)
    assert c_dim > 0 and z_dim > 0
    B = inputs.shape[0]
    total = inputs.shape[1]

    # ---- disentangle_inputs ----
    z = inputs[:, total - z_dim:]
    rest = inputs[:, :total - z_dim]
    c = rest[:, rest.shape[1] - c_dim:]
    p = rest[:, :rest.shape[1] - c_dim].reshape(B, -1, out_dim)
    N = p.shape[1]

    # ---- time handling (t folded into a per-batch fc_p bias, no HBM concat) ----
    t_flat = jnp.reshape(t, (-1,))
    assert t_flat.shape[0] == 1  # torch's t.repeat(batch_size) + view requires scalar t
    tt = jnp.tile(t_flat, B)
    if T_batch is not None:
        tt = (T_batch - tt) if invert else (T_batch + tt)
    tt = tt.astype(jnp.float32)  # (B,)

    H = params['wp'].shape[1]
    assert params['wp'].shape[0] == in_dim == out_dim + 1
    sign = -1.0 if invert else 1.0

    # fc_p split: point columns + analytically-folded time column
    wp_xyz = params['wp'][:out_dim].astype(compute_dtype)            # (out_dim, H)
    wp_t = params['wp'][out_dim:out_dim + 1].astype(jnp.float32)     # (1, H)
    bp = params['bp'].astype(jnp.float32)                            # (1, H)
    time_bias = tt[:, None] * wp_t + bp                              # (B, H)

    # per-block c/z code injections, computed once per batch outside the kernel
    cz = jnp.concatenate([c, z], axis=-1).astype(jnp.float32)                        # (B, c+z)
    wcz = jnp.concatenate([params['wc'], params['wz']], axis=1).astype(jnp.float32)  # (nb, c+z, H)
    bcz = (params['bc'] + params['bz'])[:, 0, :].astype(jnp.float32)                 # (nb, H)
    cz_bias = jnp.einsum('bk,nkh->bnh', cz, wcz,
                         preferred_element_type=jnp.float32) + bcz[None]             # (B, nb, H)

    # Fold the code injections into neighboring biases (exact: additions commute
    # with the pre-block ReLU boundary):
    #   pb[:, 0]   = fc_p time bias + block-0 injection
    #   pb[:, i+1] = b1[i] + block-(i+1) injection  (0 for the last block)
    b1_rows = params['b1'][:, 0, :].astype(jnp.float32)               # (nb, H)
    cz_next = jnp.concatenate([cz_bias[:, 1:, :],
                               jnp.zeros((B, 1, H), jnp.float32)], axis=1)
    pb = jnp.concatenate([(time_bias + cz_bias[:, 0, :])[:, None, :],
                          b1_rows[None, :, :] + cz_next], axis=1)     # (B, nb+1, H)

    # fc_out with sign folded in; kept narrow (out_dim cols) -> small HBM store
    wo = (sign * params['wo']).astype(compute_dtype)                  # (H, out_dim)
    bo = (sign * params['bo']).astype(jnp.float32)                    # (1, out_dim)

    w0 = params['w0'].astype(compute_dtype)
    w1 = params['w1'].astype(compute_dtype)
    b0 = params['b0'].astype(jnp.float32)

    # ---- tile the point dimension ----
    tile_n, n_tiles = _choose_tiles(N, tile_n, B)
    N_pad = tile_n * n_tiles
    # NOTE: bf16 point input loses mantissa for huge coordinate magnitudes vs the
    # torch f32 path; pass compute_dtype=jnp.float32 if that matters.
    p_in = p.astype(compute_dtype)
    if N_pad != N:
        p_in = jnp.pad(p_in, ((0, 0), (0, N_pad - N), (0, 0)))
    grid = (B, n_tiles)

    def wspec(arr):  # grid-invariant operand (weights / static biases)
        nd = arr.ndim
        return pl.BlockSpec(arr.shape, lambda b, n, _nd=nd: (0,) * _nd)

    in_specs = [
        pl.BlockSpec((1, tile_n, out_dim), lambda b, n: (b, n, 0)),   # points
        pl.BlockSpec((1, n_blocks + 1, H), lambda b, n: (b, 0, 0)),   # per-batch biases
        wspec(wp_xyz), wspec(w0), wspec(b0), wspec(w1),
        wspec(wo), wspec(bo),
    ]
    out_specs = pl.BlockSpec((1, tile_n, out_dim), lambda b, n: (b, n, 0))

    # VMEM budget: 2x (double-buffered) weights + lane-padded I/O blocks + acts.
    LANE = 128
    weight_bytes = sum(int(a.size) * a.dtype.itemsize
                       for a in (wp_xyz, w0, b0, w1, wo, bo))
    bias_bytes = (n_blocks + 1) * H * 4
    io_bytes = 2 * tile_n * LANE * (p_in.dtype.itemsize + 4)
    act_bytes = 8 * tile_n * H * 4
    vmem_limit = int(min(max(2 * (weight_bytes + bias_bytes) + io_bytes + act_bytes
                             + (4 << 20), 16 << 20),
                         48 << 20))   # 48 MiB cap leaves headroom on v7x (64 MiB VMEM)

    kernel = functools.partial(_velocity_kernel, n_blocks=n_blocks, out_dim=out_dim,
                               compute_dtype=compute_dtype, fc_p_on_vpu=fc_p_on_vpu)

    mv = pl.pallas_call(
        kernel,
        out_shape=jax.ShapeDtypeStruct((B, N_pad, out_dim), jnp.float32),
        grid=grid,
        in_specs=in_specs,
        out_specs=out_specs,
        compiler_params=pltpu.CompilerParams(
            dimension_semantics=("parallel", "parallel"),
            vmem_limit_bytes=vmem_limit),
    )(p_in, pb, wp_xyz, w0, b0, w1, wo, bo)

    # concat_output: strip point-dim padding, flatten, append zeros for c/z slots
    flat = mv[:, :N, :].reshape(B, -1)
    flat = jnp.concatenate([flat,
                            jnp.zeros((B, c_dim), flat.dtype),
                            jnp.zeros((B, z_dim), flat.dtype)], axis=-1)
    return flat


# ----------------------------------------------------------------------------
# Pure-JAX reference (mirrors the torch module structure, full f32).
# ----------------------------------------------------------------------------
def reference_forward(t, inputs, params, *, out_dim, c_dim, z_dim, n_blocks,
                      T_batch=None, invert=False):
    B = inputs.shape[0]
    total = inputs.shape[1]
    z = inputs[:, total - z_dim:]
    rest = inputs[:, :total - z_dim]
    c = rest[:, rest.shape[1] - c_dim:]
    p = rest[:, :rest.shape[1] - c_dim].reshape(B, -1, out_dim)
    N = p.shape[1]
    tt = jnp.tile(jnp.reshape(t, (-1,)), B)
    if T_batch is not None:
        tt = (T_batch - tt) if invert else (T_batch + tt)
    t_col = jnp.broadcast_to(tt.reshape(B, 1, 1), (B, N, 1)).astype(p.dtype)
    pt = jnp.concatenate([p, t_col], axis=-1)

    net = pt @ params['wp'] + params['bp']
    for i in range(n_blocks):
        net = net + (c @ params['wc'][i] + params['bc'][i])[:, None, :]
        net = net + (z @ params['wz'][i] + params['bz'][i])[:, None, :]
        h = jax.nn.relu(net) @ params['w0'][i] + params['b0'][i]
        dx = jax.nn.relu(h) @ params['w1'][i] + params['b1'][i]
        net = net + dx
    mv = jax.nn.relu(net) @ params['wo'] + params['bo']
    sign = -1.0 if invert else 1.0
    flat = (sign * mv).reshape(B, -1)
    flat = jnp.concatenate([flat,
                            jnp.zeros((B, c_dim), flat.dtype),
                            jnp.zeros((B, z_dim), flat.dtype)], axis=-1)
    return flat


# ----------------------------------------------------------------------------
# Deterministic parameter init (shapes from the module's __init__).
# Note: torch zero-inits fc_1.weight; here w1 gets small random values so the
# correctness check exercises the full residual path (forward semantics only).
# ----------------------------------------------------------------------------
def make_params(key, *, in_dim, hidden, out_dim, c_dim, z_dim, n_blocks):
    ks = iter(jax.random.split(key, 8 * n_blocks + 8))

    def rnd(shape, scale):
        return jax.random.normal(next(ks), shape, jnp.float32) * scale

    H = hidden
    return dict(
        wp=rnd((in_dim, H), 1.0 / math.sqrt(in_dim)),
        bp=rnd((1, H), 0.01),
        wc=jnp.stack([rnd((c_dim, H), 1.0 / math.sqrt(c_dim)) for _ in range(n_blocks)]),
        bc=jnp.stack([rnd((1, H), 0.01) for _ in range(n_blocks)]),
        wz=jnp.stack([rnd((z_dim, H), 1.0 / math.sqrt(z_dim)) for _ in range(n_blocks)]),
        bz=jnp.stack([rnd((1, H), 0.01) for _ in range(n_blocks)]),
        w0=jnp.stack([rnd((H, H), 1.0 / math.sqrt(H)) for _ in range(n_blocks)]),
        b0=jnp.stack([rnd((1, H), 0.01) for _ in range(n_blocks)]),
        w1=jnp.stack([rnd((H, H), 0.5 / math.sqrt(H)) for _ in range(n_blocks)]),
        b1=jnp.stack([rnd((1, H), 0.01) for _ in range(n_blocks)]),
        wo=rnd((H, out_dim), 1.0 / math.sqrt(H)),
        bo=rnd((1, out_dim), 0.01),
    )


if __name__ == "__main__":
    # Small shapes consistent with the module's forward semantics.
    B, n_points = 2, 72
    out_dim, in_dim = 3, 4            # in_dim = out_dim + 1 (time axis)
    c_dim, z_dim = 32, 32
    hidden, n_blocks = 128, 3

    key = jax.random.PRNGKey(0)
    k_param, k_in, k_t = jax.random.split(key, 3)

    params = make_params(k_param, in_dim=in_dim, hidden=hidden, out_dim=out_dim,
                         c_dim=c_dim, z_dim=z_dim, n_blocks=n_blocks)

    # "p" argument of forward(): concatenated [points_flat | c | z]
    total_dim = n_points * out_dim + c_dim + z_dim
    inputs = jax.random.normal(k_in, (B, total_dim), jnp.float32)
    t = jnp.array([0.5], jnp.float32)

    ref = jax.block_until_ready(reference_forward(
        t, inputs, params, out_dim=out_dim, c_dim=c_dim, z_dim=z_dim,
        n_blocks=n_blocks, T_batch=None, invert=False))

    # 1) exact structural check: f32 compute, MXU fc_p, one tile per batch
    out_f32 = jax.block_until_ready(velocity_field_forward(
        t, inputs, params,
        in_dim=in_dim, out_dim=out_dim, c_dim=c_dim, z_dim=z_dim,
        n_blocks=n_blocks, T_batch=None, invert=False,
        compute_dtype=jnp.float32))
    assert out_f32.shape == (B, total_dim), out_f32.shape
    assert jnp.allclose(out_f32, ref, rtol=1e-4, atol=1e-4), \
        float(jnp.max(jnp.abs(out_f32 - ref)))

    # 2) fc_p-on-VPU path (v5e tweak) + B=1 odd-grid rebalance + padded rows
    ref1 = jax.block_until_ready(reference_forward(
        t, inputs[:1], params, out_dim=out_dim, c_dim=c_dim, z_dim=z_dim,
        n_blocks=n_blocks, T_batch=None, invert=False))
    out_vpu = jax.block_until_ready(velocity_field_forward(
        t, inputs[:1], params,
        in_dim=in_dim, out_dim=out_dim, c_dim=c_dim, z_dim=z_dim,
        n_blocks=n_blocks, T_batch=None, invert=False,
        compute_dtype=jnp.float32, fc_p_on_vpu=True))
    assert out_vpu.shape == (1, total_dim), out_vpu.shape
    assert jnp.allclose(out_vpu, ref1, rtol=1e-4, atol=1e-4), \
        float(jnp.max(jnp.abs(out_vpu - ref1)))

    # 3) fast path: bf16 MXU operands / f32 accumulation, multi-tile grid with
    #    point-dimension padding exercised (tile_n=32 -> grid=(B, 3)).
    out_bf16 = jax.block_until_ready(velocity_field_forward(
        t, inputs, params,
        in_dim=in_dim, out_dim=out_dim, c_dim=c_dim, z_dim=z_dim,
        n_blocks=n_blocks, T_batch=None, invert=False,
        compute_dtype=jnp.bfloat16, tile_n=32))
    assert out_bf16.shape == (B, total_dim), out_bf16.shape
    err = float(jnp.max(jnp.abs(out_bf16 - ref)))
    scale = float(jnp.max(jnp.abs(ref)))
    assert err <= 5e-2 * (scale + 1.0), (err, scale)

    print("KERNEL_OK")
</pallas_src>

<mosaic_0001>
module attributes {stable_mosaic.version = 11 : i64} {
  func.func @_velocity_kernel(%arg0: i32, %arg1: i32, %arg2: memref<1x72x3xf32, #tpu.memory_space<vmem>>, %arg3: memref<1x4x128xf32, #tpu.memory_space<vmem>>, %arg4: memref<3x128xf32, #tpu.memory_space<vmem>>, %arg5: memref<3x128x128xf32, #tpu.memory_space<vmem>>, %arg6: memref<3x1x128xf32, #tpu.memory_space<vmem>>, %arg7: memref<3x128x128xf32, #tpu.memory_space<vmem>>, %arg8: memref<128x3xf32, #tpu.memory_space<vmem>>, %arg9: memref<1x3xf32, #tpu.memory_space<vmem>>, %arg10: memref<1x72x3xf32, #tpu.memory_space<vmem>>) attributes {dimension_semantics = [#tpu.dimension_semantics<parallel>, #tpu.dimension_semantics<parallel>], iteration_bounds = array<i64: 2, 1>, scalar_prefetch = 0 : i64, scratch_operands = 0 : i64, tpu.core_type = #tpu.core_type<tc>, window_params = [{transform_indices = @transform_0, window_bounds = array<i64: 1, 72, 3>}, {transform_indices = @transform_1, window_bounds = array<i64: 1, 4, 128>}, {pipeline_mode = #tpu.pipeline_mode<synchronous>, transform_indices = @transform_2, window_bounds = array<i64: 3, 128>}, {pipeline_mode = #tpu.pipeline_mode<synchronous>, transform_indices = @transform_3, window_bounds = array<i64: 3, 128, 128>}, {pipeline_mode = #tpu.pipeline_mode<synchronous>, transform_indices = @transform_4, window_bounds = array<i64: 3, 1, 128>}, {pipeline_mode = #tpu.pipeline_mode<synchronous>, transform_indices = @transform_5, window_bounds = array<i64: 3, 128, 128>}, {pipeline_mode = #tpu.pipeline_mode<synchronous>, transform_indices = @transform_6, window_bounds = array<i64: 128, 3>}, {pipeline_mode = #tpu.pipeline_mode<synchronous>, transform_indices = @transform_7, window_bounds = array<i64: 1, 3>}, {transform_indices = @transform_8, window_bounds = array<i64: 1, 72, 3>}]} {
    %c0 = arith.constant 0 : index
    %c0_0 = arith.constant 0 : index
    %c0_1 = arith.constant 0 : index
    %0 = vector.load %arg2[%c0, %c0_0, %c0_1] : memref<1x72x3xf32, #tpu.memory_space<vmem>>, vector<1x72x3xf32>
    %1 = vector.shape_cast %0 : vector<1x72x3xf32> to vector<72x3xf32>
    %c0_2 = arith.constant 0 : index
    %c0_3 = arith.constant 0 : index
    %c0_4 = arith.constant 0 : index
    %2 = vector.load %arg3[%c0_2, %c0_3, %c0_4] : memref<1x4x128xf32, #tpu.memory_space<vmem>>, vector<1x1x128xf32>
    %3 = vector.shape_cast %2 : vector<1x1x128xf32> to vector<1x128xf32>
    %c0_5 = arith.constant 0 : index
    %c0_6 = arith.constant 0 : index
    %4 = vector.load %arg4[%c0_5, %c0_6] : memref<3x128xf32, #tpu.memory_space<vmem>>, vector<3x128xf32>
    %cst = arith.constant dense<0.000000e+00> : vector<72x128xf32>
    %5 = tpu.matmul %1, %4, %cst {dimension_numbers = #tpu.dot_dimension_numbers<[1], [0], [0], [1], [0, 0, 1, 1], [], []>} : vector<72x3xf32>, vector<3x128xf32>, vector<72x128xf32> -> vector<72x128xf32>
    %6 = vector.broadcast %3 : vector<1x128xf32> to vector<72x128xf32>
    %7 = arith.addf %5, %6 : vector<72x128xf32>
    %cst_7 = arith.constant 0.000000e+00 : f32
    %8 = vector.broadcast %cst_7 : f32 to vector<72x128xf32>
    %9 = arith.maximumf %7, %8 : vector<72x128xf32>
    %c0_8 = arith.constant 0 : index
    %c0_9 = arith.constant 0 : index
    %c0_10 = arith.constant 0 : index
    %10 = vector.load %arg5[%c0_8, %c0_9, %c0_10] : memref<3x128x128xf32, #tpu.memory_space<vmem>>, vector<1x128x128xf32>
    %11 = vector.shape_cast %10 : vector<1x128x128xf32> to vector<128x128xf32>
    %cst_11 = arith.constant dense<0.000000e+00> : vector<72x128xf32>
    %12 = tpu.matmul %9, %11, %cst_11 {dimension_numbers = #tpu.dot_dimension_numbers<[1], [0], [0], [1], [0, 0, 1, 1], [], []>} : vector<72x128xf32>, vector<128x128xf32>, vector<72x128xf32> -> vector<72x128xf32>
    %c0_12 = arith.constant 0 : index
    %c0_13 = arith.constant 0 : index
    %c0_14 = arith.constant 0 : index
    %13 = vector.load %arg6[%c0_12, %c0_13, %c0_14] : memref<3x1x128xf32, #tpu.memory_space<vmem>>, vector<1x1x128xf32>
    %14 = vector.shape_cast %13 : vector<1x1x128xf32> to vector<1x128xf32>
    %15 = vector.broadcast %14 : vector<1x128xf32> to vector<72x128xf32>
    %16 = arith.addf %12, %15 : vector<72x128xf32>
    %cst_15 = arith.constant 0.000000e+00 : f32
    %17 = vector.broadcast %cst_15 : f32 to vector<72x128xf32>
    %18 = arith.maximumf %16, %17 : vector<72x128xf32>
    %c0_16 = arith.constant 0 : index
    %c0_17 = arith.constant 0 : index
    %c0_18 = arith.constant 0 : index
    %19 = vector.load %arg7[%c0_16, %c0_17, %c0_18] : memref<3x128x128xf32, #tpu.memory_space<vmem>>, vector<1x128x128xf32>
    %20 = vector.shape_cast %19 : vector<1x128x128xf32> to vector<128x128xf32>
    %cst_19 = arith.constant dense<0.000000e+00> : vector<72x128xf32>
    %21 = tpu.matmul %18, %20, %cst_19 {dimension_numbers = #tpu.dot_dimension_numbers<[1], [0], [0], [1], [0, 0, 1, 1], [], []>} : vector<72x128xf32>, vector<128x128xf32>, vector<72x128xf32> -> vector<72x128xf32>
    %c0_20 = arith.constant 0 : index
    %c1 = arith.constant 1 : index
    %c0_21 = arith.constant 0 : index
    %22 = vector.load %arg3[%c0_20, %c1, %c0_21] : memref<1x4x128xf32, #tpu.memory_space<vmem>>, vector<1x1x128xf32>
    %23 = vector.shape_cast %22 : vector<1x1x128xf32> to vector<1x128xf32>
    %24 = vector.broadcast %23 : vector<1x128xf32> to vector<72x128xf32>
    %25 = arith.addf %21, %24 : vector<72x128xf32>
    %26 = arith.addf %7, %25 : vector<72x128xf32>
    %cst_22 = arith.constant 0.000000e+00 : f32
    %27 = vector.broadcast %cst_22 : f32 to vector<72x128xf32>
    %28 = arith.maximumf %26, %27 : vector<72x128xf32>
    %c1_23 = arith.constant 1 : index
    %c0_24 = arith.constant 0 : index
    %c0_25 = arith.constant 0 : index
    %29 = vector.load %arg5[%c1_23, %c0_24, %c0_25] : memref<3x128x128xf32, #tpu.memory_space<vmem>>, vector<1x128x128xf32>
    %30 = vector.shape_cast %29 : vector<1x128x128xf32> to vector<128x128xf32>
    %cst_26 = arith.constant dense<0.000000e+00> : vector<72x128xf32>
    %31 = tpu.matmul %28, %30, %cst_26 {dimension_numbers = #tpu.dot_dimension_numbers<[1], [0], [0], [1], [0, 0, 1, 1], [], []>} : vector<72x128xf32>, vector<128x128xf32>, vector<72x128xf32> -> vector<72x128xf32>
    %c1_27 = arith.constant 1 : index
    %c0_28 = arith.constant 0 : index
    %c0_29 = arith.constant 0 : index
    %32 = vector.load %arg6[%c1_27, %c0_28, %c0_29] : memref<3x1x128xf32, #tpu.memory_space<vmem>>, vector<1x1x128xf32>
    %33 = vector.shape_cast %32 : vector<1x1x128xf32> to vector<1x128xf32>
    %34 = vector.broadcast %33 : vector<1x128xf32> to vector<72x128xf32>
    %35 = arith.addf %31, %34 : vector<72x128xf32>
    %cst_30 = arith.constant 0.000000e+00 : f32
    %36 = vector.broadcast %cst_30 : f32 to vector<72x128xf32>
    %37 = arith.maximumf %35, %36 : vector<72x128xf32>
    %c1_31 = arith.constant 1 : index
    %c0_32 = arith.constant 0 : index
    %c0_33 = arith.constant 0 : index
    %38 = vector.load %arg7[%c1_31, %c0_32, %c0_33] : memref<3x128x128xf32, #tpu.memory_space<vmem>>, vector<1x128x128xf32>
    %39 = vector.shape_cast %38 : vector<1x128x128xf32> to vector<128x128xf32>
    %cst_34 = arith.constant dense<0.000000e+00> : vector<72x128xf32>
    %40 = tpu.matmul %37, %39, %cst_34 {dimension_numbers = #tpu.dot_dimension_numbers<[1], [0], [0], [1], [0, 0, 1, 1], [], []>} : vector<72x128xf32>, vector<128x128xf32>, vector<72x128xf32> -> vector<72x128xf32>
    %c0_35 = arith.constant 0 : index
    %c2 = arith.constant 2 : index
    %c0_36 = arith.constant 0 : index
    %41 = vector.load %arg3[%c0_35, %c2, %c0_36] : memref<1x4x128xf32, #tpu.memory_space<vmem>>, vector<1x1x128xf32>
    %42 = vector.shape_cast %41 : vector<1x1x128xf32> to vector<1x128xf32>
    %43 = vector.broadcast %42 : vector<1x128xf32> to vector<72x128xf32>
    %44 = arith.addf %40, %43 : vector<72x128xf32>
    %45 = arith.addf %26, %44 : vector<72x128xf32>
    %cst_37 = arith.constant 0.000000e+00 : f32
    %46 = vector.broadcast %cst_37 : f32 to vector<72x128xf32>
    %47 = arith.maximumf %45, %46 : vector<72x128xf32>
    %c2_38 = arith.constant 2 : index
    %c0_39 = arith.constant 0 : index
    %c0_40 = arith.constant 0 : index
    %48 = vector.load %arg5[%c2_38, %c0_39, %c0_40] : memref<3x128x128xf32, #tpu.memory_space<vmem>>, vector<1x128x128xf32>
    %49 = vector.shape_cast %48 : vector<1x128x128xf32> to vector<128x128xf32>
    %cst_41 = arith.constant dense<0.000000e+00> : vector<72x128xf32>
    %50 = tpu.matmul %47, %49, %cst_41 {dimension_numbers = #tpu.dot_dimension_numbers<[1], [0], [0], [1], [0, 0, 1, 1], [], []>} : vector<72x128xf32>, vector<128x128xf32>, vector<72x128xf32> -> vector<72x128xf32>
    %c2_42 = arith.constant 2 : index
    %c0_43 = arith.constant 0 : index
    %c0_44 = arith.constant 0 : index
    %51 = vector.load %arg6[%c2_42, %c0_43, %c0_44] : memref<3x1x128xf32, #tpu.memory_space<vmem>>, vector<1x1x128xf32>
    %52 = vector.shape_cast %51 : vector<1x1x128xf32> to vector<1x128xf32>
    %53 = vector.broadcast %52 : vector<1x128xf32> to vector<72x128xf32>
    %54 = arith.addf %50, %53 : vector<72x128xf32>
    %cst_45 = arith.constant 0.000000e+00 : f32
    %55 = vector.broadcast %cst_45 : f32 to vector<72x128xf32>
    %56 = arith.maximumf %54, %55 : vector<72x128xf32>
    %c2_46 = arith.constant 2 : index
    %c0_47 = arith.constant 0 : index
    %c0_48 = arith.constant 0 : index
    %57 = vector.load %arg7[%c2_46, %c0_47, %c0_48] : memref<3x128x128xf32, #tpu.memory_space<vmem>>, vector<1x128x128xf32>
    %58 = vector.shape_cast %57 : vector<1x128x128xf32> to vector<128x128xf32>
    %cst_49 = arith.constant dense<0.000000e+00> : vector<72x128xf32>
    %59 = tpu.matmul %56, %58, %cst_49 {dimension_numbers = #tpu.dot_dimension_numbers<[1], [0], [0], [1], [0, 0, 1, 1], [], []>} : vector<72x128xf32>, vector<128x128xf32>, vector<72x128xf32> -> vector<72x128xf32>
    %c0_50 = arith.constant 0 : index
    %c3 = arith.constant 3 : index
    %c0_51 = arith.constant 0 : index
    %60 = vector.load %arg3[%c0_50, %c3, %c0_51] : memref<1x4x128xf32, #tpu.memory_space<vmem>>, vector<1x1x128xf32>
    %61 = vector.shape_cast %60 : vector<1x1x128xf32> to vector<1x128xf32>
    %62 = vector.broadcast %61 : vector<1x128xf32> to vector<72x128xf32>
    %63 = arith.addf %59, %62 : vector<72x128xf32>
    %64 = arith.addf %45, %63 : vector<72x128xf32>
    %cst_52 = arith.constant 0.000000e+00 : f32
    %65 = vector.broadcast %cst_52 : f32 to vector<72x128xf32>
    %66 = arith.maximumf %64, %65 : vector<72x128xf32>
    %c0_53 = arith.constant 0 : index
    %c0_54 = arith.constant 0 : index
    %67 = vector.load %arg8[%c0_53, %c0_54] : memref<128x3xf32, #tpu.memory_space<vmem>>, vector<128x3xf32>
    %cst_55 = arith.constant dense<0.000000e+00> : vector<72x3xf32>
    %68 = tpu.matmul %66, %67, %cst_55 {dimension_numbers = #tpu.dot_dimension_numbers<[1], [0], [0], [1], [0, 0, 1, 1], [], []>} : vector<72x128xf32>, vector<128x3xf32>, vector<72x3xf32> -> vector<72x3xf32>
    %c0_56 = arith.constant 0 : index
    %c0_57 = arith.constant 0 : index
    %69 = vector.load %arg9[%c0_56, %c0_57] : memref<1x3xf32, #tpu.memory_space<vmem>>, vector<1x3xf32>
    %70 = vector.broadcast %69 : vector<1x3xf32> to vector<72x3xf32>
    %71 = arith.addf %68, %70 : vector<72x3xf32>
    %c0_58 = arith.constant 0 : index
    %c0_59 = arith.constant 0 : index
    %c0_60 = arith.constant 0 : index
    %72 = vector.load %arg10[%c0_58, %c0_59, %c0_60] : memref<1x72x3xf32, #tpu.memory_space<vmem>>, vector<1x72x3xf32>
    %73 = vector.shape_cast %72 : vector<1x72x3xf32> to vector<72x3xf32>
    %74 = vector.shape_cast %71 : vector<72x3xf32> to vector<1x72x3xf32>
    tpu.vector_store %arg10[%c0_58, %c0_59, %c0_60], %74 {strides = array<i32>} : memref<1x72x3xf32, #tpu.memory_space<vmem>>, vector<1x72x3xf32>,
    return
  }
  func.func @transform_0(%arg0: i32, %arg1: i32) -> (i32, i32, i32) {
    %c0_i32 = arith.constant 0 : i32
    %c0_i32_0 = arith.constant 0 : i32
    return %arg0, %arg1, %c0_i32 : i32, i32, i32
  }
  func.func @transform_1(%arg0: i32, %arg1: i32) -> (i32, i32, i32) {
    %c0_i32 = arith.constant 0 : i32
    %c0_i32_0 = arith.constant 0 : i32
    %c0_i32_1 = arith.constant 0 : i32
    return %arg0, %c0_i32, %c0_i32_0 : i32, i32, i32
  }
  func.func @transform_2(%arg0: i32, %arg1: i32) -> (i32, i32) {
    %c0_i32 = arith.constant 0 : i32
    %c0_i32_0 = arith.constant 0 : i32
    %c0_i32_1 = arith.constant 0 : i32
    return %c0_i32, %c0_i32_0 : i32, i32
  }
  func.func @transform_3(%arg0: i32, %arg1: i32) -> (i32, i32, i32) {
    %c0_i32 = arith.constant 0 : i32
    %c0_i32_0 = arith.constant 0 : i32
    %c0_i32_1 = arith.constant 0 : i32
    %c0_i32_2 = arith.constant 0 : i32
    return %c0_i32, %c0_i32_0, %c0_i32_1 : i32, i32, i32
  }
  func.func @transform_4(%arg0: i32, %arg1: i32) -> (i32, i32, i32) {
    %c0_i32 = arith.constant 0 : i32
    %c0_i32_0 = arith.constant 0 : i32
    %c0_i32_1 = arith.constant 0 : i32
    %c0_i32_2 = arith.constant 0 : i32
    return %c0_i32, %c0_i32_0, %c0_i32_1 : i32, i32, i32
  }
  func.func @transform_5(%arg0: i32, %arg1: i32) -> (i32, i32, i32) {
    %c0_i32 = arith.constant 0 : i32
    %c0_i32_0 = arith.constant 0 : i32
    %c0_i32_1 = arith.constant 0 : i32
    %c0_i32_2 = arith.constant 0 : i32
    return %c0_i32, %c0_i32_0, %c0_i32_1 : i32, i32, i32
  }
  func.func @transform_6(%arg0: i32, %arg1: i32) -> (i32, i32) {
    %c0_i32 = arith.constant 0 : i32
    %c0_i32_0 = arith.constant 0 : i32
    %c0_i32_1 = arith.constant 0 : i32
    return %c0_i32, %c0_i32_0 : i32, i32
  }
  func.func @transform_7(%arg0: i32, %arg1: i32) -> (i32, i32) {
    %c0_i32 = arith.constant 0 : i32
    %c0_i32_0 = arith.constant 0 : i32
    %c0_i32_1 = arith.constant 0 : i32
    return %c0_i32, %c0_i32_0 : i32, i32
  }
  func.func @transform_8(%arg0: i32, %arg1: i32) -> (i32, i32, i32) {
    %c0_i32 = arith.constant 0 : i32
    %c0_i32_0 = arith.constant 0 : i32
    return %arg0, %arg1, %c0_i32 : i32, i32, i32
  }
}

</mosaic_0001>

<llo_original>
// kernel: tpu_custom_call.1
$region0: #{tpu_custom_call.1}
  #allocation0 [shape = 'u32[]', space=smem, size = 0x4, offset = 0x4, fixed_abs, tag = 'smem constant byte address 0x4 - core index']
  #allocation1 [shape = 'u32[144,128]{1,0:T(1,128)}', space=vmem, size = 0x12000, scoped, tag = 'internal scratch']
  %s0 = inlined_call_operand.vmem [shape: f32[2,72,3], index: 0, kind: input, shape index: {}]
  %s1 = inlined_call_operand.vmem [shape: f32[2,4,128], index: 1, kind: input, shape index: {}]
  %s2 = inlined_call_operand.vmem [shape: f32[3,128], index: 2, kind: input, shape index: {}]
  %s3 = inlined_call_operand.hbm [shape: f32[3,128,128], index: 3, kind: input, shape index: {}]
  %s4 = inlined_call_operand.vmem [shape: f32[3,1,128], index: 4, kind: input, shape index: {}]
  %s5 = inlined_call_operand.hbm [shape: f32[3,128,128], index: 5, kind: input, shape index: {}]
  %s6 = inlined_call_operand.vmem [shape: f32[128,3], index: 6, kind: input, shape index: {}]
  %s7 = inlined_call_operand.vmem [shape: f32[1,3], index: 7, kind: input, shape index: {}]
  %s8 = inlined_call_operand.vmem [shape: f32[2,72,3], index: 8, kind: output, shape index: {}]
  %s9 = sld [smem:[#allocation0]]
  $region73: #{tpu_custom_call.1} parent=0
    _
  %s11 = ssub.s32 1, %s9
  %s12 = scalar_select 0, %s11, %s9
  $region1: #{tpu_custom_call.1} parent=0
    #allocation2 [shape = 'u8[196608]{0}', space=vmem, size = 0x30000, scoped, tag = 'input window, operand 3, single buffered']
    #allocation3 [shape = 's32[2]{0}', space=sflag, size = 0x8, scoped, tag = 'scoped memory for tpu_custom_call.1']
    #allocation4 [shape = 'u8[196608]{0}', space=vmem, size = 0x30000, scoped, tag = 'input window, operand 5, single buffered']
    #allocation5 [shape = 's32[1]{0}', space=sflag, size = 0x4, scoped, tag = 'scoped memory for tpu_custom_call.1']
    %13 = vsyncpa [#allocation3], 0
    %14 = vsyncpa [#allocation5], 0
    loop: start=0, step=1, limit=4
    $region2: #{tpu_custom_call.1} parent=1 // loop_pre_header
      _
    $region3: #{tpu_custom_call.1} parent=1 // loop_header
      %s16 = sphi 0, %s20
      %p17 = scmp.ge.s32.totalorder %s16, 4
      %s23 = sphi 0, %s35
      %s24 = sphi 0, %s31
      %s25 = sphi 0, %s23
      %s26 = sphi 0, %s24
      %s27 = sphi 0, %s25
      %s28 = sphi 0, %s26
      %s40 = sphi 0, %s42
      %s43 = sphi 0, %s40
      %s44 = sphi 0, %s43
      %s60 = sphi 0, %s44
      %s66 = sphi 0, %s68
      %s69 = sphi 0, %s66
      %s70 = sphi 0, %s69
      %s86 = sphi 0, %s70
      %s90 = sphi 0, %s90
      %s92 = sphi 0, %s90
      %s93 = sphi 0, %s92
      %s107 = sphi 0, %s93
      %s111 = sphi 0, %s111
      %s113 = sphi 0, %s111
      %s114 = sphi 0, %s113
      %s128 = sphi 0, %s114
      %s132 = sphi 0, %s132
      %s134 = sphi 0, %s132
      %s135 = sphi 0, %s134
      %s149 = sphi 0, %s135
      %s153 = sphi 0, %s153
      %s155 = sphi 0, %s153
      %s156 = sphi 0, %s155
      %s170 = sphi 0, %s156
      %s174 = sphi 0, %s174
      %s176 = sphi 0, %s174
      %s177 = sphi 0, %s176
      %s191 = sphi 0, %s177
      %s195 = sphi 0, %s195
      %s197 = sphi 0, %s195
      %s198 = sphi 0, %s197
      %s212 = sphi 0, %s198
      %s220 = sphi 0, %s222
      %s223 = sphi 0, %s220
      %s224 = sphi 0, %s223
      %s240 = sphi 0, %s224
    $region4: #{tpu_custom_call.1} parent=1 // loop_header_branch
      %19 = sbr.rel (%p17) target = $region8
    $region5: #{tpu_custom_call.1} parent=1 // loop_body
      %s21 = ssub.s32 %s16, 1
      %s22 = ssub.s32 %s16, 2
      %s29 = sadd.s32 1, %s24
      %p30 = scmp.ge.s32.totalorder %s29, 1
      %s31 = scalar_select %p30, 0, %s29
      %s32 = sadd.s32 1, %s23
      %s33 = scalar_select %p30, %s32, %s23
      %p34 = scmp.ge.s32.totalorder %s33, 2
      %s35 = scalar_select %p34, 0, %s33
      %s36 = ssub.s32 %s23, %s35
      %s37 = ssub.s32 %s24, %s31
      %s38 = sor.u32 %s36, %s37
      %p39 = scmp.eq.s32.totalorder %s38, 0
      %s41 = sadd.s32 %s40, 1
      %s42 = scalar_select %p39, %s40, %s41
      %p45 = pneg %p39
      %p46 = scmp.eq.s32.totalorder %s16, 1
      %p47 = por %p45, %p46
      %p48 = scmp.ne.s32.totalorder %s40, %s43
      %p49 = scmp.eq.s32.totalorder %s16, 0
      %p50 = por %p48, %p49
      %p51 = scmp.ne.s32.totalorder %s40, %s43
      %p52 = scmp.eq.s32.totalorder %s21, 1
      %p53 = por %p51, %p52
      %p54 = scmp.ne.s32.totalorder %s43, %s44
      %p55 = scmp.eq.s32.totalorder %s21, 0
      %p56 = por %p54, %p55
      %p57 = scmp.ne.s32.totalorder %s43, %s44
      %p58 = scmp.eq.s32.totalorder %s22, 1
      %p59 = por %p57, %p58
      %p61 = scmp.ne.s32.totalorder %s44, %s60
      %p62 = scmp.eq.s32.totalorder %s22, 0
      %p63 = por %p61, %p62
      %s64 = ssub.s32 %s23, %s35
      %p65 = scmp.eq.s32.totalorder %s64, 0
      %s67 = sadd.s32 %s66, 1
      %s68 = scalar_select %p65, %s66, %s67
      %p71 = pneg %p65
      %p72 = scmp.eq.s32.totalorder %s16, 1
      %p73 = por %p71, %p72
      %p74 = scmp.ne.s32.totalorder %s66, %s69
      %p75 = scmp.eq.s32.totalorder %s16, 0
      %p76 = por %p74, %p75
      %p77 = scmp.ne.s32.totalorder %s66, %s69
      %p78 = scmp.eq.s32.totalorder %s21, 1
      %p79 = por %p77, %p78
      %p80 = scmp.ne.s32.totalorder %s69, %s70
      %p81 = scmp.eq.s32.totalorder %s21, 0
      %p82 = por %p80, %p81
      %p83 = scmp.ne.s32.totalorder %s69, %s70
      %p84 = scmp.eq.s32.totalorder %s22, 1
      %p85 = por %p83, %p84
      %p87 = scmp.ne.s32.totalorder %s70, %s86
      %p88 = scmp.eq.s32.totalorder %s22, 0
      %p89 = por %p87, %p88
      %s91 = sadd.s32 %s90, 1
      %p94 = scmp.eq.s32.totalorder %s16, 1
      %p95 = scmp.ne.s32.totalorder %s90, %s92
      %p96 = scmp.eq.s32.totalorder %s16, 0
      %p97 = por %p95, %p96
      %p98 = scmp.ne.s32.totalorder %s90, %s92
      %p99 = scmp.eq.s32.totalorder %s21, 1
      %p100 = por %p98, %p99
      %p101 = scmp.ne.s32.totalorder %s92, %s93
      %p102 = scmp.eq.s32.totalorder %s21, 0
      %p103 = por %p101, %p102
      %p104 = scmp.ne.s32.totalorder %s92, %s93
      %p105 = scmp.eq.s32.totalorder %s22, 1
      %p106 = por %p104, %p105
      %p108 = scmp.ne.s32.totalorder %s93, %s107
      %p109 = scmp.eq.s32.totalorder %s22, 0
      %p110 = por %p108, %p109
      %s112 = sadd.s32 %s111, 1
      %p115 = scmp.eq.s32.totalorder %s16, 1
      %p116 = scmp.ne.s32.totalorder %s111, %s113
      %p117 = scmp.eq.s32.totalorder %s16, 0
      %p118 = por %p116, %p117
      %p119 = scmp.ne.s32.totalorder %s111, %s113
      %p120 = scmp.eq.s32.totalorder %s21, 1
      %p121 = por %p119, %p120
      %p122 = scmp.ne.s32.totalorder %s113, %s114
      %p123 = scmp.eq.s32.totalorder %s21, 0
      %p124 = por %p122, %p123
      %p125 = scmp.ne.s32.totalorder %s113, %s114
      %p126 = scmp.eq.s32.totalorder %s22, 1
      %p127 = por %p125, %p126
      %p129 = scmp.ne.s32.totalorder %s114, %s128
      %p130 = scmp.eq.s32.totalorder %s22, 0
      %p131 = por %p129, %p130
      %s133 = sadd.s32 %s132, 1
      %p136 = scmp.eq.s32.totalorder %s16, 1
      %p137 = scmp.ne.s32.totalorder %s132, %s134
      %p138 = scmp.eq.s32.totalorder %s16, 0
      %p139 = por %p137, %p138
      %p140 = scmp.ne.s32.totalorder %s132, %s134
      %p141 = scmp.eq.s32.totalorder %s21, 1
      %p142 = por %p140, %p141
      %p143 = scmp.ne.s32.totalorder %s134, %s135
      %p144 = scmp.eq.s32.totalorder %s21, 0
      %p145 = por %p143, %p144
      %p146 = scmp.ne.s32.totalorder %s134, %s135
      %p147 = scmp.eq.s32.totalorder %s22, 1
      %p148 = por %p146, %p147
      %p150 = scmp.ne.s32.totalorder %s135, %s149
      %p151 = scmp.eq.s32.totalorder %s22, 0
      %p152 = por %p150, %p151
      %s154 = sadd.s32 %s153, 1
      %p157 = scmp.eq.s32.totalorder %s16, 1
      %p158 = scmp.ne.s32.totalorder %s153, %s155
      %p159 = scmp.eq.s32.totalorder %s16, 0
      %p160 = por %p158, %p159
      %p161 = scmp.ne.s32.totalorder %s153, %s155
      %p162 = scmp.eq.s32.totalorder %s21, 1
      %p163 = por %p161, %p162
      %p164 = scmp.ne.s32.totalorder %s155, %s156
      %p165 = scmp.eq.s32.totalorder %s21, 0
      %p166 = por %p164, %p165
      %p167 = scmp.ne.s32.totalorder %s155, %s156
      %p168 = scmp.eq.s32.totalorder %s22, 1
      %p169 = por %p167, %p168
      %p171 = scmp.ne.s32.totalorder %s156, %s170
      %p172 = scmp.eq.s32.totalorder %s22, 0
      %p173 = por %p171, %p172
      %s175 = sadd.s32 %s174, 1
      %p178 = scmp.eq.s32.totalorder %s16, 1
      %p179 = scmp.ne.s32.totalorder %s174, %s176
      %p180 = scmp.eq.s32.totalorder %s16, 0
      %p181 = por %p179, %p180
      %p182 = scmp.ne.s32.totalorder %s174, %s176
      %p183 = scmp.eq.s32.totalorder %s21, 1
      %p184 = por %p182, %p183
      %p185 = scmp.ne.s32.totalorder %s176, %s177
      %p186 = scmp.eq.s32.totalorder %s21, 0
      %p187 = por %p185, %p186
      %p188 = scmp.ne.s32.totalorder %s176, %s177
      %p189 = scmp.eq.s32.totalorder %s22, 1
      %p190 = por %p188, %p189
      %p192 = scmp.ne.s32.totalorder %s177, %s191
      %p193 = scmp.eq.s32.totalorder %s22, 0
      %p194 = por %p192, %p193
      %s196 = sadd.s32 %s195, 1
      %p199 = scmp.eq.s32.totalorder %s16, 1
      %p200 = scmp.ne.s32.totalorder %s195, %s197
      %p201 = scmp.eq.s32.totalorder %s16, 0
      %p202 = por %p200, %p201
      %p203 = scmp.ne.s32.totalorder %s195, %s197
      %p204 = scmp.eq.s32.totalorder %s21, 1
      %p205 = por %p203, %p204
      %p206 = scmp.ne.s32.totalorder %s197, %s198
      %p207 = scmp.eq.s32.totalorder %s21, 0
      %p208 = por %p206, %p207
      %p209 = scmp.ne.s32.totalorder %s197, %s198
      %p210 = scmp.eq.s32.totalorder %s22, 1
      %p211 = por %p209, %p210
      %p213 = scmp.ne.s32.totalorder %s198, %s212
      %p214 = scmp.eq.s32.totalorder %s22, 0
      %p215 = por %p213, %p214
      %s216 = ssub.s32 %s23, %s35
      %s217 = ssub.s32 %s24, %s31
      %s218 = sor.u32 %s216, %s217
      %p219 = scmp.eq.s32.totalorder %s218, 0
      %s221 = sadd.s32 %s220, 1
      %s222 = scalar_select %p219, %s220, %s221
      %p225 = pneg %p219
      %p226 = scmp.eq.s32.totalorder %s16, 1
      %p227 = por %p225, %p226
      %p228 = scmp.ne.s32.totalorder %s220, %s223
      %p229 = scmp.eq.s32.totalorder %s16, 0
      %p230 = por %p228, %p229
      %p231 = scmp.ne.s32.totalorder %s220, %s223
      %p232 = scmp.eq.s32.totalorder %s21, 1
      %p233 = por %p231, %p232
      %p234 = scmp.ne.s32.totalorder %s223, %s224
      %p235 = scmp.eq.s32.totalorder %s21, 0
      %p236 = por %p234, %p235
      %p237 = scmp.ne.s32.totalorder %s223, %s224
      %p238 = scmp.eq.s32.totalorder %s22, 1
      %p239 = por %p237, %p238
      %p241 = scmp.ne.s32.totalorder %s224, %s240
      %p242 = scmp.eq.s32.totalorder %s22, 0
      %p243 = por %p241, %p242
      %p244 = scmp.le.s32.totalorder 1, %s16
      %p245 = scmp.lt.s32.totalorder %s16, 3
      %p246 = pnand %p244, %p245
      %p247 = pneg %p246
      // Predicated region
      $region9: #{tpu_custom_call.1} parent=5 // pred_check
        _
      $region10: #{tpu_custom_call.1} parent=5 // pred_check_branch
        %249 = sbr.rel (%p246) target = $region12
      $region11: #{tpu_custom_call.1} parent=5 // pred_region
        %s250 = ssub.s32 %s16, 1
        // Predicated region
        $region13: #{tpu_custom_call.1} parent=11 // pred_check
          %p251 = pneg %p103
        $region14: #{tpu_custom_call.1} parent=11 // pred_check_branch
          %253 = sbr.rel (%p251) target = $region16
        $region15: #{tpu_custom_call.1} parent=11 // pred_region
          _
        $region16: #{tpu_custom_call.1} parent=11 // pred_fallthru
          _
        // Predicated region
        $region17: #{tpu_custom_call.1} parent=11 // pred_check
          %p254 = pneg %p124
        $region18: #{tpu_custom_call.1} parent=11 // pred_check_branch
          %256 = sbr.rel (%p254) target = $region20
        $region19: #{tpu_custom_call.1} parent=11 // pred_region
          %s258 = ssub.s32 6144, 6144
          %259 = vsyncadd [#allocation3], %s258
          %s260 = sshll.u32 [#allocation2], 4
          %s261 = int_to_ptr.vmem [resolvable:$true] %s260
          %266 = dma.hbm_to_vmem [thread:$0]  %s3, 6144, %s261, [#allocation3], 128, 128, 8
        $region20: #{tpu_custom_call.1} parent=11 // pred_fallthru
          _
        // Predicated region
        $region21: #{tpu_custom_call.1} parent=11 // pred_check
          %p267 = pneg %p145
        $region22: #{tpu_custom_call.1} parent=11 // pred_check_branch
          %269 = sbr.rel (%p267) target = $region24
        $region23: #{tpu_custom_call.1} parent=11 // pred_region
          _
        $region24: #{tpu_custom_call.1} parent=11 // pred_fallthru
          _
        // Predicated region
        $region25: #{tpu_custom_call.1} parent=11 // pred_check
          %p270 = pneg %p166
        $region26: #{tpu_custom_call.1} parent=11 // pred_check_branch
          %272 = sbr.rel (%p270) target = $region28
        $region27: #{tpu_custom_call.1} parent=11 // pred_region
          %s274 = ssub.s32 6144, 6144
          %275 = vsyncadd [#allocation5], %s274
          %s276 = sshll.u32 [#allocation4], 4
          %s277 = int_to_ptr.vmem [resolvable:$true] %s276
          %282 = dma.hbm_to_vmem [thread:$0]  %s5, 6144, %s277, [#allocation5], 128, 128, 8
        $region28: #{tpu_custom_call.1} parent=11 // pred_fallthru
          _
        // Predicated region
        $region29: #{tpu_custom_call.1} parent=11 // pred_check
          %p283 = pneg %p187
        $region30: #{tpu_custom_call.1} parent=11 // pred_check_branch
          %285 = sbr.rel (%p283) target = $region32
        $region31: #{tpu_custom_call.1} parent=11 // pred_region
          _
        $region32: #{tpu_custom_call.1} parent=11 // pred_fallthru
          _
        // Predicated region
        $region33: #{tpu_custom_call.1} parent=11 // pred_check
          %p286 = pneg %p208
        $region34: #{tpu_custom_call.1} parent=11 // pred_check_branch
          %288 = sbr.rel (%p286) target = $region36
        $region35: #{tpu_custom_call.1} parent=11 // pred_region
          _
        $region36: #{tpu_custom_call.1} parent=11 // pred_fallthru
          _
      $region12: #{tpu_custom_call.1} parent=5 // pred_fallthru
        _
      %p289 = scmp.lt.s32.totalorder %s16, 2
      // Predicated region
      $region37: #{tpu_custom_call.1} parent=5 // pred_check
        %p290 = pneg %p289
      $region38: #{tpu_custom_call.1} parent=5 // pred_check_branch
        %292 = sbr.rel (%p290) target = $region40
      $region39: #{tpu_custom_call.1} parent=5 // pred_region
        // Predicated region
        $region41: #{tpu_custom_call.1} parent=39 // pred_check
          %p293 = pneg %p50
        $region42: #{tpu_custom_call.1} parent=39 // pred_check_branch
          %295 = sbr.rel (%p293) target = $region44
        $region43: #{tpu_custom_call.1} parent=39 // pred_region
          %s296 = smul.u32 9, %s24
          %p297 = scmp.lt.s32.totalorder %s23, 1
          %s298 = scalar_select %p297, %s23, 1
          %p299 = scmp.lt.s32.totalorder %s296, 8
          %s300 = scalar_select %p299, %s296, 8
          %s301 = smul.addr %s298, 9
          %s302 = sadd.s32 %s300, %s301
          %s303 = smul.addr %s302, 8
          %s304 = scalar_lea.vmem %s0, %s303
          %s305 = smul.u32 9, %s24
        $region44: #{tpu_custom_call.1} parent=39 // pred_fallthru
          _
        // Predicated region
        $region45: #{tpu_custom_call.1} parent=39 // pred_check
          %p306 = pneg %p76
        $region46: #{tpu_custom_call.1} parent=39 // pred_check_branch
          %308 = sbr.rel (%p306) target = $region48
        $region47: #{tpu_custom_call.1} parent=39 // pred_region
          %p309 = scmp.lt.s32.totalorder %s23, 1
          %s310 = scalar_select %p309, %s23, 1
          %s311 = smul.addr %s310, 4
          %s312 = scalar_lea.vmem %s1, %s311
        $region48: #{tpu_custom_call.1} parent=39 // pred_fallthru
          _
      $region40: #{tpu_custom_call.1} parent=5 // pred_fallthru
        _
      %p313 = scmp.le.s32.totalorder 1, %s16
      %p314 = scmp.lt.s32.totalorder %s16, 3
      %p315 = pnand %p313, %p314
      %p316 = pneg %p315
      // Predicated region
      $region49: #{tpu_custom_call.1} parent=5 // pred_check
        _
      $region50: #{tpu_custom_call.1} parent=5 // pred_check_branch
        %318 = sbr.rel (%p315) target = $region52
      $region51: #{tpu_custom_call.1} parent=5 // pred_region
        %s319 = ssub.s32 %s16, 1
        // Predicated region
        $region53: #{tpu_custom_call.1} parent=51 // pred_check
          %p320 = pneg %p124
        $region54: #{tpu_custom_call.1} parent=51 // pred_check_branch
          %322 = sbr.rel (%p320) target = $region56
        $region55: #{tpu_custom_call.1} parent=51 // pred_region
          %323 = dma.done [#allocation3], 6144
        $region56: #{tpu_custom_call.1} parent=51 // pred_fallthru
          _
        // Predicated region
        $region57: #{tpu_custom_call.1} parent=51 // pred_check
          %p324 = pneg %p166
        $region58: #{tpu_custom_call.1} parent=51 // pred_check_branch
          %326 = sbr.rel (%p324) target = $region60
        $region59: #{tpu_custom_call.1} parent=51 // pred_region
          %327 = dma.done [#allocation5], 6144
        $region60: #{tpu_custom_call.1} parent=51 // pred_fallthru
          _
        %s328 = smul.u32 9, %s26
        %p329 = scmp.lt.s32.totalorder %s25, 1
        %s330 = scalar_select %p329, %s25, 1
        %p331 = scmp.lt.s32.totalorder %s328, 8
        %s332 = scalar_select %p331, %s328, 8
        %s333 = smul.addr %s330, 9
        %s334 = sadd.s32 %s332, %s333
        %s335 = smul.addr %s334, 8
        %s336 = scalar_lea.vmem %s0, %s335
        %p337 = pneg %p56
        %p338 = pneg %p53
        %p339 = scmp.lt.s32.totalorder %s25, 1
        %s340 = scalar_select %p339, %s25, 1
        %s341 = smul.addr %s340, 4
        %s342 = scalar_lea.vmem %s1, %s341
        %p343 = pneg %p82
        %p344 = pneg %p79
        %p345 = pneg %p103
        %p346 = pneg %p100
        %p347 = pneg %p124
        %p348 = pneg %p121
        %p349 = pneg %p145
        %p350 = pneg %p142
        %p351 = pneg %p166
        %p352 = pneg %p163
        %p353 = pneg %p187
        %p354 = pneg %p184
        %p355 = pneg %p208
        %p356 = pneg %p205
        %p357 = pneg %p236
        %p358 = pneg %p233
        %s359 = smul.u32 9, %s26
        %p360 = scmp.lt.s32.totalorder %s25, 1
        %s361 = scalar_select %p360, %s25, 1
        %p362 = scmp.lt.s32.totalorder %s359, 8
        %s363 = scalar_select %p362, %s359, 8
        %s364 = smul.addr %s361, 9
        %s365 = sadd.s32 %s363, %s364
        %s366 = smul.addr %s365, 8
        %s367 = scalar_lea.vmem %s8, %s366
        %s368 = smul.u32 9, %s26
        %p369 = scmp.lt.s32.totalorder %s25, 1
        %s370 = scalar_select %p369, %s25, 1
        %p371 = scmp.lt.s32.totalorder %s368, 8
        %s372 = scalar_select %p371, %s368, 8
        %s373 = smul.addr %s370, 9
        %s374 = sadd.s32 %s372, %s373
        %s375 = smul.addr %s374, 8
        %s376 = scalar_lea.vmem %s0, %s375
        %s377 = smul.u32 9, %s26
        %p378 = scmp.lt.s32.totalorder %s25, 1
        %s379 = scalar_select %p378, %s25, 1
        %s380 = smul.addr %s379, 4
        %s381 = scalar_lea.vmem %s1, %s380
        %s382 = smul.u32 9, %s26
        %p383 = scmp.lt.s32.totalorder %s25, 1
        %s384 = scalar_select %p383, %s25, 1
        %p385 = scmp.lt.s32.totalorder %s382, 8
        %s386 = scalar_select %p385, %s382, 8
        %s387 = smul.addr %s384, 9
        %s388 = sadd.s32 %s386, %s387
        %s389 = smul.addr %s388, 8
        %s390 = scalar_lea.vmem %s8, %s389
        %s391 = smul.u32 9, %s26
        %v392 = vld [vmem:[%s376] sm:$0xff]
        %v393 = vld [vmem:[%s376 + $0x8] sm:$0xff]
        %v394 = vld [vmem:[%s376 + $0x10] sm:$0xff]
        %v395 = vld [vmem:[%s376 + $0x18] sm:$0xff]
        %v396 = vld [vmem:[%s376 + $0x20] sm:$0xff]
        %v397 = vld [vmem:[%s376 + $0x28] sm:$0xff]
        %v398 = vld [vmem:[%s376 + $0x30] sm:$0xff]
        %v399 = vld [vmem:[%s376 + $0x38] sm:$0xff]
        %v400 = vld [vmem:[%s376 + $0x40] sm:$0xff]
        %v401 = vld [vmem:[%s381] sm:$0x1]
        %v402 = vld [vmem:[%s2] sm:$0x7]
        %v403 = vlaneseq
        %v404 = vshrl.u32 %v403, 7
        %v405 = vsub.s32 0, %v404
        %v406 = vrot.slane %v401, %v405
        %vm407 = vcmask 23552
        %v409 = vsel %vm407, %v392, 0
        %v412 = vsel %vm407, %v393, 0
        %v415 = vsel %vm407, %v394, 0
        %v418 = vsel %vm407, %v395, 0
        %v421 = vsel %vm407, %v396, 0
        %v424 = vsel %vm407, %v397, 0
        %v427 = vsel %vm407, %v398, 0
        %v430 = vsel %vm407, %v399, 0
        %v433 = vsel %vm407, %v400, 0
        %vm435 = vcmask 1042432
        %v437 = vsel %vm435, %v402, 0
        %439 = vmatprep.subr.mxu0 0.0
        %440 = vmatpush1.msra.mxu0 0.0
        %441 = vmatprep.subr.mxu0 0.0
        %442 = vmatpush1.msra.mxu0 0.0
        %443 = vmatprep.subr.mxu0 0.0
        %444 = vmatpush1.msra.mxu0 0.0
        %445 = vmatprep.subr.mxu0 0.0
        %446 = vmatpush1.msra.mxu0 0.0
        %447 = vmatprep.subr.mxu0 0.0
        %448 = vmatpush1.msra.mxu0 0.0
        %449 = vmatprep.subr.mxu0 0.0
        %450 = vmatpush1.msra.mxu0 0.0
        %451 = vmatprep.subr.mxu0 0.0
        %452 = vmatpush1.msra.mxu0 0.0
        %453 = vmatprep.subr.mxu0 0.0
        %454 = vmatpush1.msra.mxu0 0.0
        %455 = vmatprep.subr.mxu0 0.0
        %456 = vmatpush1.msra.mxu0 0.0
        %457 = vmatprep.subr.mxu0 0.0
        %458 = vmatpush1.msra.mxu0 0.0
        %459 = vmatprep.subr.mxu0 0.0
        %460 = vmatpush1.msra.mxu0 0.0
        %461 = vmatprep.subr.mxu0 0.0
        %462 = vmatpush1.msra.mxu0 0.0
        %463 = vmatprep.subr.mxu0 0.0
        %464 = vmatpush1.msra.mxu0 0.0
        %465 = vmatprep.subr.mxu0 0.0
        %466 = vmatpush1.msra.mxu0 0.0
        %467 = vmatprep.subr.mxu0 0.0
        %468 = vmatpush1.msra.mxu0 0.0
        %469 = vmatprep.subr.mxu0 0.0
        %470 = vmatpush1.msra.mxu0 %v437
        %471 = vmatprep.subr.mxu0 0.0
        %472 = vmatpush2.msra.mxu0 0.0
        %473 = vmatprep.subr.mxu0 0.0
        %474 = vmatpush2.msra.mxu0 0.0
        %475 = vmatprep.subr.mxu0 0.0
        %476 = vmatpush2.msra.mxu0 0.0
        %477 = vmatprep.subr.mxu0 0.0
        %478 = vmatpush2.msra.mxu0 0.0
        %479 = vmatprep.subr.mxu0 0.0
        %480 = vmatpush2.msra.mxu0 0.0
        %481 = vmatprep.subr.mxu0 0.0
        %482 = vmatpush2.msra.mxu0 0.0
        %483 = vmatprep.subr.mxu0 0.0
        %484 = vmatpush2.msra.mxu0 0.0
        %485 = vmatprep.subr.mxu0 0.0
        %486 = vmatpush2.msra.mxu0 0.0
        %487 = vmatprep.subr.mxu0 0.0
        %488 = vmatpush2.msra.mxu0 0.0
        %489 = vmatprep.subr.mxu0 0.0
        %490 = vmatpush2.msra.mxu0 0.0
        %491 = vmatprep.subr.mxu0 0.0
        %492 = vmatpush2.msra.mxu0 0.0
        %493 = vmatprep.subr.mxu0 0.0
        %494 = vmatpush2.msra.mxu0 0.0
        %495 = vmatprep.subr.mxu0 0.0
        %496 = vmatpush2.msra.mxu0 0.0
        %497 = vmatprep.subr.mxu0 0.0
        %498 = vmatpush2.msra.mxu0 0.0
        %499 = vmatprep.subr.mxu0 0.0
        %500 = vmatpush2.msra.mxu0 0.0
        %501 = vmatprep.subr.mxu0 0.0
        %502 = vmatpush2.msra.mxu0 0.0
        %503 = vmatprep.mubr.f32.mxu0 0.0
        %504 = vmatmul.mubr.f32.gmra.mxu0 %v409
        %v505 = vpop.f32.mrf.mxu0
        %v506 = vadd.f32 %v406, %v505
        %v507 = vpop.f32.mrf.mxu0
        %508 = vmatprep.mubr.f32.mxu0 0.0
        %509 = vmatmul.mubr.f32.gmra.mxu0 %v412
        %v510 = vpop.f32.mrf.mxu0
        %v511 = vadd.f32 %v406, %v510
        %v512 = vpop.f32.mrf.mxu0
        %513 = vmatprep.mubr.f32.mxu0 0.0
        %514 = vmatmul.mubr.f32.gmra.mxu0 %v415
        %v515 = vpop.f32.mrf.mxu0
        %v516 = vadd.f32 %v406, %v515
        %v517 = vpop.f32.mrf.mxu0
        %518 = vmatprep.mubr.f32.mxu0 0.0
        %519 = vmatmul.mubr.f32.gmra.mxu0 %v418
        %v520 = vpop.f32.mrf.mxu0
        %v521 = vadd.f32 %v406, %v520
        %v522 = vpop.f32.mrf.mxu0
        %523 = vmatprep.mubr.f32.mxu0 0.0
        %524 = vmatmul.mubr.f32.gmra.mxu0 %v421
        %v525 = vpop.f32.mrf.mxu0
        %v526 = vadd.f32 %v406, %v525
        %v527 = vpop.f32.mrf.mxu0
        %528 = vmatprep.mubr.f32.mxu0 0.0
        %529 = vmatmul.mubr.f32.gmra.mxu0 %v424
        %v530 = vpop.f32.mrf.mxu0
        %v531 = vadd.f32 %v406, %v530
        %v532 = vpop.f32.mrf.mxu0
        %533 = vmatprep.mubr.f32.mxu0 0.0
        %534 = vmatmul.mubr.f32.gmra.mxu0 %v427
        %v535 = vpop.f32.mrf.mxu0
        %v536 = vadd.f32 %v406, %v535
        %v537 = vpop.f32.mrf.mxu0
        %538 = vmatprep.mubr.f32.mxu0 0.0
        %539 = vmatmul.mubr.f32.gmra.mxu0 %v430
        %v540 = vpop.f32.mrf.mxu0
        %v541 = vadd.f32 %v406, %v540
        %v542 = vpop.f32.mrf.mxu0
        %543 = vmatprep.mubr.f32.mxu0 0.0
        %544 = vmatmul.mubr.f32.gmra.mxu0 %v433
        %v545 = vpop.f32.mrf.mxu0
        %v546 = vadd.f32 %v406, %v545
        %v547 = vpop.f32.mrf.mxu0
        %548 = vdwg.mxu0
        %v549 = vmax.f32 %v506, 0.0
        %v550 = vmax.f32 %v511, 0.0
        %v551 = vmax.f32 %v516, 0.0
        %v552 = vmax.f32 %v521, 0.0
        %v553 = vmax.f32 %v526, 0.0
        %v554 = vmax.f32 %v531, 0.0
        %v555 = vmax.f32 %v536, 0.0
        %v556 = vmax.f32 %v541, 0.0
        %v557 = vmax.f32 %v546, 0.0
        %v558 = vld [vmem:[#allocation2] sm:$0xff]
        %v559 = vld [vmem:[#allocation2 + $0x8] sm:$0xff]
        %v560 = vld [vmem:[#allocation2 + $0x10] sm:$0xff]
        %v561 = vld [vmem:[#allocation2 + $0x18] sm:$0xff]
        %v562 = vld [vmem:[#allocation2 + $0x20] sm:$0xff]
        %v563 = vld [vmem:[#allocation2 + $0x28] sm:$0xff]
        %v564 = vld [vmem:[#allocation2 + $0x30] sm:$0xff]
        %v565 = vld [vmem:[#allocation2 + $0x38] sm:$0xff]
        %v566 = vld [vmem:[#allocation2 + $0x40] sm:$0xff]
        %v567 = vld [vmem:[#allocation2 + $0x48] sm:$0xff]
        %v568 = vld [vmem:[#allocation2 + $0x50] sm:$0xff]
        %v569 = vld [vmem:[#allocation2 + $0x58] sm:$0xff]
        %v570 = vld [vmem:[#allocation2 + $0x60] sm:$0xff]
        %v571 = vld [vmem:[#allocation2 + $0x68] sm:$0xff]
        %v572 = vld [vmem:[#allocation2 + $0x70] sm:$0xff]
        %v573 = vld [vmem:[#allocation2 + $0x78] sm:$0xff]
        %v574 = vld [vmem:[%s4] sm:$0x1]
        %v576 = vlaneseq
        %v577 = vshrl.u32 %v576, 7
        %v578 = vsub.s32 0, %v577
        %v579 = vrot.slane %v574, %v578
        %581 = vmatprep.subr.mxu0 0.0
        %582 = vmatpush1.msra.mxu0 %v573
        %583 = vmatprep.subr.mxu0 0.0
        %584 = vmatpush1.msra.mxu0 %v572
        %585 = vmatprep.subr.mxu0 0.0
        %586 = vmatpush1.msra.mxu0 %v571
        %587 = vmatprep.subr.mxu0 0.0
        %588 = vmatpush1.msra.mxu0 %v570
        %589 = vmatprep.subr.mxu0 0.0
        %590 = vmatpush1.msra.mxu0 %v569
        %591 = vmatprep.subr.mxu0 0.0
        %592 = vmatpush1.msra.mxu0 %v568
        %593 = vmatprep.subr.mxu0 0.0
        %594 = vmatpush1.msra.mxu0 %v567
        %595 = vmatprep.subr.mxu0 0.0
        %596 = vmatpush1.msra.mxu0 %v566
        %597 = vmatprep.subr.mxu0 0.0
        %598 = vmatpush1.msra.mxu0 %v565
        %599 = vmatprep.subr.mxu0 0.0
        %600 = vmatpush1.msra.mxu0 %v564
        %601 = vmatprep.subr.mxu0 0.0
        %602 = vmatpush1.msra.mxu0 %v563
        %603 = vmatprep.subr.mxu0 0.0
        %604 = vmatpush1.msra.mxu0 %v562
        %605 = vmatprep.subr.mxu0 0.0
        %606 = vmatpush1.msra.mxu0 %v561
        %607 = vmatprep.subr.mxu0 0.0
        %608 = vmatpush1.msra.mxu0 %v560
        %609 = vmatprep.subr.mxu0 0.0
        %610 = vmatpush1.msra.mxu0 %v559
        %611 = vmatprep.subr.mxu0 0.0
        %612 = vmatpush1.msra.mxu0 %v558
        %613 = vmatprep.subr.mxu0 0.0
        %614 = vmatpush2.msra.mxu0 0.0
        %615 = vmatprep.subr.mxu0 0.0
        %616 = vmatpush2.msra.mxu0 0.0
        %617 = vmatprep.subr.mxu0 0.0
        %618 = vmatpush2.msra.mxu0 0.0
        %619 = vmatprep.subr.mxu0 0.0
        %620 = vmatpush2.msra.mxu0 0.0
        %621 = vmatprep.subr.mxu0 0.0
        %622 = vmatpush2.msra.mxu0 0.0
        %623 = vmatprep.subr.mxu0 0.0
        %624 = vmatpush2.msra.mxu0 0.0
        %625 = vmatprep.subr.mxu0 0.0
        %626 = vmatpush2.msra.mxu0 0.0
        %627 = vmatprep.subr.mxu0 0.0
        %628 = vmatpush2.msra.mxu0 0.0
        %629 = vmatprep.subr.mxu0 0.0
        %630 = vmatpush2.msra.mxu0 0.0
        %631 = vmatprep.subr.mxu0 0.0
        %632 = vmatpush2.msra.mxu0 0.0
        %633 = vmatprep.subr.mxu0 0.0
        %634 = vmatpush2.msra.mxu0 0.0
        %635 = vmatprep.subr.mxu0 0.0
        %636 = vmatpush2.msra.mxu0 0.0
        %637 = vmatprep.subr.mxu0 0.0
        %638 = vmatpush2.msra.mxu0 0.0
        %639 = vmatprep.subr.mxu0 0.0
        %640 = vmatpush2.msra.mxu0 0.0
        %641 = vmatprep.subr.mxu0 0.0
        %642 = vmatpush2.msra.mxu0 0.0
        %643 = vmatprep.subr.mxu0 0.0
        %644 = vmatpush2.msra.mxu0 0.0
        %645 = vmatprep.mubr.f32.mxu0 0.0
        %646 = vmatmul.mubr.f32.gmra.mxu0 %v549
        %v647 = vpop.f32.mrf.mxu0
        %v648 = vadd.f32 %v579, %v647
        %v649 = vpop.f32.mrf.mxu0
        %650 = vmatprep.mubr.f32.mxu0 0.0
        %651 = vmatmul.mubr.f32.gmra.mxu0 %v550
        %v652 = vpop.f32.mrf.mxu0
        %v653 = vadd.f32 %v579, %v652
        %v654 = vpop.f32.mrf.mxu0
        %655 = vmatprep.mubr.f32.mxu0 0.0
        %656 = vmatmul.mubr.f32.gmra.mxu0 %v551
        %v657 = vpop.f32.mrf.mxu0
        %v658 = vadd.f32 %v579, %v657
        %v659 = vpop.f32.mrf.mxu0
        %660 = vmatprep.mubr.f32.mxu0 0.0
        %661 = vmatmul.mubr.f32.gmra.mxu0 %v552
        %v662 = vpop.f32.mrf.mxu0
        %v663 = vadd.f32 %v579, %v662
        %v664 = vpop.f32.mrf.mxu0
        %665 = vmatprep.mubr.f32.mxu0 0.0
        %666 = vmatmul.mubr.f32.gmra.mxu0 %v553
        %v667 = vpop.f32.mrf.mxu0
        %v668 = vadd.f32 %v579, %v667
        %v669 = vpop.f32.mrf.mxu0
        %670 = vmatprep.mubr.f32.mxu0 0.0
        %671 = vmatmul.mubr.f32.gmra.mxu0 %v554
        %v672 = vpop.f32.mrf.mxu0
        %v673 = vadd.f32 %v579, %v672
        %v674 = vpop.f32.mrf.mxu0
        %675 = vmatprep.mubr.f32.mxu0 0.0
        %676 = vmatmul.mubr.f32.gmra.mxu0 %v555
        %v677 = vpop.f32.mrf.mxu0
        %v678 = vadd.f32 %v579, %v677
        %v679 = vpop.f32.mrf.mxu0
        %680 = vmatprep.mubr.f32.mxu0 0.0
        %681 = vmatmul.mubr.f32.gmra.mxu0 %v556
        %v682 = vpop.f32.mrf.mxu0
        %v683 = vadd.f32 %v579, %v682
        %v684 = vpop.f32.mrf.mxu0
        %685 = vmatprep.mubr.f32.mxu0 0.0
        %686 = vmatmul.mubr.f32.gmra.mxu0 %v557
        %v687 = vpop.f32.mrf.mxu0
        %v688 = vadd.f32 %v579, %v687
        %v689 = vpop.f32.mrf.mxu0
        %690 = vdwg.mxu0
        %v691 = vmax.f32 %v648, 0.0
        %v692 = vmax.f32 %v653, 0.0
        %v693 = vmax.f32 %v658, 0.0
        %v694 = vmax.f32 %v663, 0.0
        %v695 = vmax.f32 %v668, 0.0
        %v696 = vmax.f32 %v673, 0.0
        %v697 = vmax.f32 %v678, 0.0
        %v698 = vmax.f32 %v683, 0.0
        %v699 = vmax.f32 %v688, 0.0
        %v700 = vld [vmem:[#allocation4] sm:$0xff]
        %v701 = vld [vmem:[#allocation4 + $0x8] sm:$0xff]
        %v702 = vld [vmem:[#allocation4 + $0x10] sm:$0xff]
        %v703 = vld [vmem:[#allocation4 + $0x18] sm:$0xff]
        %v704 = vld [vmem:[#allocation4 + $0x20] sm:$0xff]
        %v705 = vld [vmem:[#allocation4 + $0x28] sm:$0xff]
        %v706 = vld [vmem:[#allocation4 + $0x30] sm:$0xff]
        %v707 = vld [vmem:[#allocation4 + $0x38] sm:$0xff]
        %v708 = vld [vmem:[#allocation4 + $0x40] sm:$0xff]
        %v709 = vld [vmem:[#allocation4 + $0x48] sm:$0xff]
        %v710 = vld [vmem:[#allocation4 + $0x50] sm:$0xff]
        %v711 = vld [vmem:[#allocation4 + $0x58] sm:$0xff]
        %v712 = vld [vmem:[#allocation4 + $0x60] sm:$0xff]
        %v713 = vld [vmem:[#allocation4 + $0x68] sm:$0xff]
        %v714 = vld [vmem:[#allocation4 + $0x70] sm:$0xff]
        %v715 = vld [vmem:[#allocation4 + $0x78] sm:$0xff]
        %v716 = vld [vmem:[%s381 + $0x1] sm:$0x1]
        %v717 = vlaneseq
        %v718 = vshrl.u32 %v717, 7
        %v719 = vsub.s32 0, %v718
        %v720 = vrot.slane %v716, %v719
        %721 = vmatprep.subr.mxu0 0.0
        %722 = vmatpush1.msra.mxu0 %v715
        %723 = vmatprep.subr.mxu0 0.0
        %724 = vmatpush1.msra.mxu0 %v714
        %725 = vmatprep.subr.mxu0 0.0
        %726 = vmatpush1.msra.mxu0 %v713
        %727 = vmatprep.subr.mxu0 0.0
        %728 = vmatpush1.msra.mxu0 %v712
        %729 = vmatprep.subr.mxu0 0.0
        %730 = vmatpush1.msra.mxu0 %v711
        %731 = vmatprep.subr.mxu0 0.0
        %732 = vmatpush1.msra.mxu0 %v710
        %733 = vmatprep.subr.mxu0 0.0
        %734 = vmatpush1.msra.mxu0 %v709
        %735 = vmatprep.subr.mxu0 0.0
        %736 = vmatpush1.msra.mxu0 %v708
        %737 = vmatprep.subr.mxu0 0.0
        %738 = vmatpush1.msra.mxu0 %v707
        %739 = vmatprep.subr.mxu0 0.0
        %740 = vmatpush1.msra.mxu0 %v706
        %741 = vmatprep.subr.mxu0 0.0
        %742 = vmatpush1.msra.mxu0 %v705
        %743 = vmatprep.subr.mxu0 0.0
        %744 = vmatpush1.msra.mxu0 %v704
        %745 = vmatprep.subr.mxu0 0.0
        %746 = vmatpush1.msra.mxu0 %v703
        %747 = vmatprep.subr.mxu0 0.0
        %748 = vmatpush1.msra.mxu0 %v702
        %749 = vmatprep.subr.mxu0 0.0
        %750 = vmatpush1.msra.mxu0 %v701
        %751 = vmatprep.subr.mxu0 0.0
        %752 = vmatpush1.msra.mxu0 %v700
        %753 = vmatprep.subr.mxu0 0.0
        %754 = vmatpush2.msra.mxu0 0.0
        %755 = vmatprep.subr.mxu0 0.0
        %756 = vmatpush2.msra.mxu0 0.0
        %757 = vmatprep.subr.mxu0 0.0
        %758 = vmatpush2.msra.mxu0 0.0
        %759 = vmatprep.subr.mxu0 0.0
        %760 = vmatpush2.msra.mxu0 0.0
        %761 = vmatprep.subr.mxu0 0.0
        %762 = vmatpush2.msra.mxu0 0.0
        %763 = vmatprep.subr.mxu0 0.0
        %764 = vmatpush2.msra.mxu0 0.0
        %765 = vmatprep.subr.mxu0 0.0
        %766 = vmatpush2.msra.mxu0 0.0
        %767 = vmatprep.subr.mxu0 0.0
        %768 = vmatpush2.msra.mxu0 0.0
        %769 = vmatprep.subr.mxu0 0.0
        %770 = vmatpush2.msra.mxu0 0.0
        %771 = vmatprep.subr.mxu0 0.0
        %772 = vmatpush2.msra.mxu0 0.0
        %773 = vmatprep.subr.mxu0 0.0
        %774 = vmatpush2.msra.mxu0 0.0
        %775 = vmatprep.subr.mxu0 0.0
        %776 = vmatpush2.msra.mxu0 0.0
        %777 = vmatprep.subr.mxu0 0.0
        %778 = vmatpush2.msra.mxu0 0.0
        %779 = vmatprep.subr.mxu0 0.0
        %780 = vmatpush2.msra.mxu0 0.0
        %781 = vmatprep.subr.mxu0 0.0
        %782 = vmatpush2.msra.mxu0 0.0
        %783 = vmatprep.subr.mxu0 0.0
        %784 = vmatpush2.msra.mxu0 0.0
        %785 = vmatprep.mubr.f32.mxu0 0.0
        %786 = vmatmul.mubr.f32.gmra.mxu0 %v691
        %v787 = vpop.f32.mrf.mxu0
        %v788 = vadd.f32 %v720, %v787
        %v789 = vpop.f32.mrf.mxu0
        %790 = vmatprep.mubr.f32.mxu0 0.0
        %791 = vmatmul.mubr.f32.gmra.mxu0 %v692
        %v792 = vpop.f32.mrf.mxu0
        %v793 = vadd.f32 %v720, %v792
        %v794 = vpop.f32.mrf.mxu0
        %795 = vmatprep.mubr.f32.mxu0 0.0
        %796 = vmatmul.mubr.f32.gmra.mxu0 %v693
        %v797 = vpop.f32.mrf.mxu0
        %v798 = vadd.f32 %v720, %v797
        %v799 = vpop.f32.mrf.mxu0
        %800 = vmatprep.mubr.f32.mxu0 0.0
        %801 = vmatmul.mubr.f32.gmra.mxu0 %v694
        %v802 = vpop.f32.mrf.mxu0
        %v803 = vadd.f32 %v720, %v802
        %v804 = vpop.f32.mrf.mxu0
        %805 = vmatprep.mubr.f32.mxu0 0.0
        %806 = vmatmul.mubr.f32.gmra.mxu0 %v695
        %v807 = vpop.f32.mrf.mxu0
        %v808 = vadd.f32 %v720, %v807
        %v809 = vpop.f32.mrf.mxu0
        %810 = vmatprep.mubr.f32.mxu0 0.0
        %811 = vmatmul.mubr.f32.gmra.mxu0 %v696
        %v812 = vpop.f32.mrf.mxu0
        %v813 = vadd.f32 %v720, %v812
        %v814 = vpop.f32.mrf.mxu0
        %815 = vmatprep.mubr.f32.mxu0 0.0
        %816 = vmatmul.mubr.f32.gmra.mxu0 %v697
        %v817 = vpop.f32.mrf.mxu0
        %v818 = vadd.f32 %v720, %v817
        %v819 = vpop.f32.mrf.mxu0
        %820 = vmatprep.mubr.f32.mxu0 0.0
        %821 = vmatmul.mubr.f32.gmra.mxu0 %v698
        %v822 = vpop.f32.mrf.mxu0
        %v823 = vadd.f32 %v720, %v822
        %v824 = vpop.f32.mrf.mxu0
        %825 = vmatprep.mubr.f32.mxu0 0.0
        %826 = vmatmul.mubr.f32.gmra.mxu0 %v699
        %v827 = vpop.f32.mrf.mxu0
        %v828 = vadd.f32 %v720, %v827
        %v829 = vpop.f32.mrf.mxu0
        %830 = vdwg.mxu0
        %v831 = vadd.f32 %v506, %v788
        %v832 = vadd.f32 %v511, %v793
        %v833 = vadd.f32 %v516, %v798
        %v834 = vadd.f32 %v521, %v803
        %v835 = vadd.f32 %v526, %v808
        %v836 = vadd.f32 %v531, %v813
        %v837 = vadd.f32 %v536, %v818
        %v838 = vadd.f32 %v541, %v823
        %v839 = vadd.f32 %v546, %v828
        %v840 = vmax.f32 %v831, 0.0
        %v841 = vmax.f32 %v832, 0.0
        %v842 = vmax.f32 %v833, 0.0
        %v843 = vmax.f32 %v834, 0.0
        %v844 = vmax.f32 %v835, 0.0
        %v845 = vmax.f32 %v836, 0.0
        %v846 = vmax.f32 %v837, 0.0
        %v847 = vmax.f32 %v838, 0.0
        %v848 = vmax.f32 %v839, 0.0
        %s849 = scalar_lea.vmem [#allocation2], 128
        %v850 = vld [vmem:[%s849] sm:$0xff]
        %v851 = vld [vmem:[%s849 + $0x8] sm:$0xff]
        %v852 = vld [vmem:[%s849 + $0x10] sm:$0xff]
        %v853 = vld [vmem:[%s849 + $0x18] sm:$0xff]
        %v854 = vld [vmem:[%s849 + $0x20] sm:$0xff]
        %v855 = vld [vmem:[%s849 + $0x28] sm:$0xff]
        %v856 = vld [vmem:[%s849 + $0x30] sm:$0xff]
        %v857 = vld [vmem:[%s849 + $0x38] sm:$0xff]
        %v858 = vld [vmem:[%s849 + $0x40] sm:$0xff]
        %v859 = vld [vmem:[%s849 + $0x48] sm:$0xff]
        %v860 = vld [vmem:[%s849 + $0x50] sm:$0xff]
        %v861 = vld [vmem:[%s849 + $0x58] sm:$0xff]
        %v862 = vld [vmem:[%s849 + $0x60] sm:$0xff]
        %v863 = vld [vmem:[%s849 + $0x68] sm:$0xff]
        %v864 = vld [vmem:[%s849 + $0x70] sm:$0xff]
        %v865 = vld [vmem:[%s849 + $0x78] sm:$0xff]
        %s866 = scalar_lea.vmem %s4, 1
        %v867 = vld [vmem:[%s866] sm:$0x1]
        %v869 = vlaneseq
        %v870 = vshrl.u32 %v869, 7
        %v871 = vsub.s32 0, %v870
        %v872 = vrot.slane %v867, %v871
        %874 = vmatprep.subr.mxu0 0.0
        %875 = vmatpush1.msra.mxu0 %v865
        %876 = vmatprep.subr.mxu0 0.0
        %877 = vmatpush1.msra.mxu0 %v864
        %878 = vmatprep.subr.mxu0 0.0
        %879 = vmatpush1.msra.mxu0 %v863
        %880 = vmatprep.subr.mxu0 0.0
        %881 = vmatpush1.msra.mxu0 %v862
        %882 = vmatprep.subr.mxu0 0.0
        %883 = vmatpush1.msra.mxu0 %v861
        %884 = vmatprep.subr.mxu0 0.0
        %885 = vmatpush1.msra.mxu0 %v860
        %886 = vmatprep.subr.mxu0 0.0
        %887 = vmatpush1.msra.mxu0 %v859
        %888 = vmatprep.subr.mxu0 0.0
        %889 = vmatpush1.msra.mxu0 %v858
        %890 = vmatprep.subr.mxu0 0.0
        %891 = vmatpush1.msra.mxu0 %v857
        %892 = vmatprep.subr.mxu0 0.0
        %893 = vmatpush1.msra.mxu0 %v856
        %894 = vmatprep.subr.mxu0 0.0
        %895 = vmatpush1.msra.mxu0 %v855
        %896 = vmatprep.subr.mxu0 0.0
        %897 = vmatpush1.msra.mxu0 %v854
        %898 = vmatprep.subr.mxu0 0.0
        %899 = vmatpush1.msra.mxu0 %v853
        %900 = vmatprep.subr.mxu0 0.0
        %901 = vmatpush1.msra.mxu0 %v852
        %902 = vmatprep.subr.mxu0 0.0
        %903 = vmatpush1.msra.mxu0 %v851
        %904 = vmatprep.subr.mxu0 0.0
        %905 = vmatpush1.msra.mxu0 %v850
        %906 = vmatprep.subr.mxu0 0.0
        %907 = vmatpush2.msra.mxu0 0.0
        %908 = vmatprep.subr.mxu0 0.0
        %909 = vmatpush2.msra.mxu0 0.0
        %910 = vmatprep.subr.mxu0 0.0
        %911 = vmatpush2.msra.mxu0 0.0
        %912 = vmatprep.subr.mxu0 0.0
        %913 = vmatpush2.msra.mxu0 0.0
        %914 = vmatprep.subr.mxu0 0.0
        %915 = vmatpush2.msra.mxu0 0.0
        %916 = vmatprep.subr.mxu0 0.0
        %917 = vmatpush2.msra.mxu0 0.0
        %918 = vmatprep.subr.mxu0 0.0
        %919 = vmatpush2.msra.mxu0 0.0
        %920 = vmatprep.subr.mxu0 0.0
        %921 = vmatpush2.msra.mxu0 0.0
        %922 = vmatprep.subr.mxu0 0.0
        %923 = vmatpush2.msra.mxu0 0.0
        %924 = vmatprep.subr.mxu0 0.0
        %925 = vmatpush2.msra.mxu0 0.0
        %926 = vmatprep.subr.mxu0 0.0
        %927 = vmatpush2.msra.mxu0 0.0
        %928 = vmatprep.subr.mxu0 0.0
        %929 = vmatpush2.msra.mxu0 0.0
        %930 = vmatprep.subr.mxu0 0.0
        %931 = vmatpush2.msra.mxu0 0.0
        %932 = vmatprep.subr.mxu0 0.0
        %933 = vmatpush2.msra.mxu0 0.0
        %934 = vmatprep.subr.mxu0 0.0
        %935 = vmatpush2.msra.mxu0 0.0
        %936 = vmatprep.subr.mxu0 0.0
        %937 = vmatpush2.msra.mxu0 0.0
        %938 = vmatprep.mubr.f32.mxu0 0.0
        %939 = vmatmul.mubr.f32.gmra.mxu0 %v840
        %v940 = vpop.f32.mrf.mxu0
        %v941 = vadd.f32 %v872, %v940
        %v942 = vpop.f32.mrf.mxu0
        %943 = vmatprep.mubr.f32.mxu0 0.0
        %944 = vmatmul.mubr.f32.gmra.mxu0 %v841
        %v945 = vpop.f32.mrf.mxu0
        %v946 = vadd.f32 %v872, %v945
        %v947 = vpop.f32.mrf.mxu0
        %948 = vmatprep.mubr.f32.mxu0 0.0
        %949 = vmatmul.mubr.f32.gmra.mxu0 %v842
        %v950 = vpop.f32.mrf.mxu0
        %v951 = vadd.f32 %v872, %v950
        %v952 = vpop.f32.mrf.mxu0
        %953 = vmatprep.mubr.f32.mxu0 0.0
        %954 = vmatmul.mubr.f32.gmra.mxu0 %v843
        %v955 = vpop.f32.mrf.mxu0
        %v956 = vadd.f32 %v872, %v955
        %v957 = vpop.f32.mrf.mxu0
        %958 = vmatprep.mubr.f32.mxu0 0.0
        %959 = vmatmul.mubr.f32.gmra.mxu0 %v844
        %v960 = vpop.f32.mrf.mxu0
        %v961 = vadd.f32 %v872, %v960
        %v962 = vpop.f32.mrf.mxu0
        %963 = vmatprep.mubr.f32.mxu0 0.0
        %964 = vmatmul.mubr.f32.gmra.mxu0 %v845
        %v965 = vpop.f32.mrf.mxu0
        %v966 = vadd.f32 %v872, %v965
        %v967 = vpop.f32.mrf.mxu0
        %968 = vmatprep.mubr.f32.mxu0 0.0
        %969 = vmatmul.mubr.f32.gmra.mxu0 %v846
        %v970 = vpop.f32.mrf.mxu0
        %v971 = vadd.f32 %v872, %v970
        %v972 = vpop.f32.mrf.mxu0
        %973 = vmatprep.mubr.f32.mxu0 0.0
        %974 = vmatmul.mubr.f32.gmra.mxu0 %v847
        %v975 = vpop.f32.mrf.mxu0
        %v976 = vadd.f32 %v872, %v975
        %v977 = vpop.f32.mrf.mxu0
        %978 = vmatprep.mubr.f32.mxu0 0.0
        %979 = vmatmul.mubr.f32.gmra.mxu0 %v848
        %v980 = vpop.f32.mrf.mxu0
        %v981 = vadd.f32 %v872, %v980
        %v982 = vpop.f32.mrf.mxu0
        %983 = vdwg.mxu0
        %v984 = vmax.f32 %v941, 0.0
        %v985 = vmax.f32 %v946, 0.0
        %v986 = vmax.f32 %v951, 0.0
        %v987 = vmax.f32 %v956, 0.0
        %v988 = vmax.f32 %v961, 0.0
        %v989 = vmax.f32 %v966, 0.0
        %v990 = vmax.f32 %v971, 0.0
        %v991 = vmax.f32 %v976, 0.0
        %v992 = vmax.f32 %v981, 0.0
        %s993 = scalar_lea.vmem [#allocation4], 128
        %v994 = vld [vmem:[%s993] sm:$0xff]
        %v995 = vld [vmem:[%s993 + $0x8] sm:$0xff]
        %v996 = vld [vmem:[%s993 + $0x10] sm:$0xff]
        %v997 = vld [vmem:[%s993 + $0x18] sm:$0xff]
        %v998 = vld [vmem:[%s993 + $0x20] sm:$0xff]
        %v999 = vld [vmem:[%s993 + $0x28] sm:$0xff]
        %v1000 = vld [vmem:[%s993 + $0x30] sm:$0xff]
        %v1001 = vld [vmem:[%s993 + $0x38] sm:$0xff]
        %v1002 = vld [vmem:[%s993 + $0x40] sm:$0xff]
        %v1003 = vld [vmem:[%s993 + $0x48] sm:$0xff]
        %v1004 = vld [vmem:[%s993 + $0x50] sm:$0xff]
        %v1005 = vld [vmem:[%s993 + $0x58] sm:$0xff]
        %v1006 = vld [vmem:[%s993 + $0x60] sm:$0xff]
        %v1007 = vld [vmem:[%s993 + $0x68] sm:$0xff]
        %v1008 = vld [vmem:[%s993 + $0x70] sm:$0xff]
        %v1009 = vld [vmem:[%s993 + $0x78] sm:$0xff]
        %v1010 = vld [vmem:[%s381 + $0x2] sm:$0x1]
        %v1011 = vlaneseq
        %v1012 = vshrl.u32 %v1011, 7
        %v1013 = vsub.s32 0, %v1012
        %v1014 = vrot.slane %v1010, %v1013
        %1015 = vmatprep.subr.mxu0 0.0
        %1016 = vmatpush1.msra.mxu0 %v1009
        %1017 = vmatprep.subr.mxu0 0.0
        %1018 = vmatpush1.msra.mxu0 %v1008
        %1019 = vmatprep.subr.mxu0 0.0
        %1020 = vmatpush1.msra.mxu0 %v1007
        %1021 = vmatprep.subr.mxu0 0.0
        %1022 = vmatpush1.msra.mxu0 %v1006
        %1023 = vmatprep.subr.mxu0 0.0
        %1024 = vmatpush1.msra.mxu0 %v1005
        %1025 = vmatprep.subr.mxu0 0.0
        %1026 = vmatpush1.msra.mxu0 %v1004
        %1027 = vmatprep.subr.mxu0 0.0
        %1028 = vmatpush1.msra.mxu0 %v1003
        %1029 = vmatprep.subr.mxu0 0.0
        %1030 = vmatpush1.msra.mxu0 %v1002
        %1031 = vmatprep.subr.mxu0 0.0
        %1032 = vmatpush1.msra.mxu0 %v1001
        %1033 = vmatprep.subr.mxu0 0.0
        %1034 = vmatpush1.msra.mxu0 %v1000
        %1035 = vmatprep.subr.mxu0 0.0
        %1036 = vmatpush1.msra.mxu0 %v999
        %1037 = vmatprep.subr.mxu0 0.0
        %1038 = vmatpush1.msra.mxu0 %v998
        %1039 = vmatprep.subr.mxu0 0.0
        %1040 = vmatpush1.msra.mxu0 %v997
        %1041 = vmatprep.subr.mxu0 0.0
        %1042 = vmatpush1.msra.mxu0 %v996
        %1043 = vmatprep.subr.mxu0 0.0
        %1044 = vmatpush1.msra.mxu0 %v995
        %1045 = vmatprep.subr.mxu0 0.0
        %1046 = vmatpush1.msra.mxu0 %v994
        %1047 = vmatprep.subr.mxu0 0.0
        %1048 = vmatpush2.msra.mxu0 0.0
        %1049 = vmatprep.subr.mxu0 0.0
        %1050 = vmatpush2.msra.mxu0 0.0
        %1051 = vmatprep.subr.mxu0 0.0
        %1052 = vmatpush2.msra.mxu0 0.0
        %1053 = vmatprep.subr.mxu0 0.0
        %1054 = vmatpush2.msra.mxu0 0.0
        %1055 = vmatprep.subr.mxu0 0.0
        %1056 = vmatpush2.msra.mxu0 0.0
        %1057 = vmatprep.subr.mxu0 0.0
        %1058 = vmatpush2.msra.mxu0 0.0
        %1059 = vmatprep.subr.mxu0 0.0
        %1060 = vmatpush2.msra.mxu0 0.0
        %1061 = vmatprep.subr.mxu0 0.0
        %1062 = vmatpush2.msra.mxu0 0.0
        %1063 = vmatprep.subr.mxu0 0.0
        %1064 = vmatpush2.msra.mxu0 0.0
        %1065 = vmatprep.subr.mxu0 0.0
        %1066 = vmatpush2.msra.mxu0 0.0
        %1067 = vmatprep.subr.mxu0 0.0
        %1068 = vmatpush2.msra.mxu0 0.0
        %1069 = vmatprep.subr.mxu0 0.0
        %1070 = vmatpush2.msra.mxu0 0.0
        %1071 = vmatprep.subr.mxu0 0.0
        %1072 = vmatpush2.msra.mxu0 0.0
        %1073 = vmatprep.subr.mxu0 0.0
        %1074 = vmatpush2.msra.mxu0 0.0
        %1075 = vmatprep.subr.mxu0 0.0
        %1076 = vmatpush2.msra.mxu0 0.0
        %1077 = vmatprep.subr.mxu0 0.0
        %1078 = vmatpush2.msra.mxu0 0.0
        %1079 = vmatprep.mubr.f32.mxu0 0.0
        %1080 = vmatmul.mubr.f32.gmra.mxu0 %v984
        %v1081 = vpop.f32.mrf.mxu0
        %v1082 = vadd.f32 %v1014, %v1081
        %v1083 = vpop.f32.mrf.mxu0
        %1084 = vmatprep.mubr.f32.mxu0 0.0
        %1085 = vmatmul.mubr.f32.gmra.mxu0 %v985
        %v1086 = vpop.f32.mrf.mxu0
        %v1087 = vadd.f32 %v1014, %v1086
        %v1088 = vpop.f32.mrf.mxu0
        %1089 = vmatprep.mubr.f32.mxu0 0.0
        %1090 = vmatmul.mubr.f32.gmra.mxu0 %v986
        %v1091 = vpop.f32.mrf.mxu0
        %v1092 = vadd.f32 %v1014, %v1091
        %v1093 = vpop.f32.mrf.mxu0
        %1094 = vmatprep.mubr.f32.mxu0 0.0
        %1095 = vmatmul.mubr.f32.gmra.mxu0 %v987
        %v1096 = vpop.f32.mrf.mxu0
        %v1097 = vadd.f32 %v1014, %v1096
        %v1098 = vpop.f32.mrf.mxu0
        %1099 = vmatprep.mubr.f32.mxu0 0.0
        %1100 = vmatmul.mubr.f32.gmra.mxu0 %v988
        %v1101 = vpop.f32.mrf.mxu0
        %v1102 = vadd.f32 %v1014, %v1101
        %v1103 = vpop.f32.mrf.mxu0
        %1104 = vmatprep.mubr.f32.mxu0 0.0
        %1105 = vmatmul.mubr.f32.gmra.mxu0 %v989
        %v1106 = vpop.f32.mrf.mxu0
        %v1107 = vadd.f32 %v1014, %v1106
        %v1108 = vpop.f32.mrf.mxu0
        %1109 = vmatprep.mubr.f32.mxu0 0.0
        %1110 = vmatmul.mubr.f32.gmra.mxu0 %v990
        %v1111 = vpop.f32.mrf.mxu0
        %v1112 = vadd.f32 %v1014, %v1111
        %v1113 = vpop.f32.mrf.mxu0
        %1114 = vmatprep.mubr.f32.mxu0 0.0
        %1115 = vmatmul.mubr.f32.gmra.mxu0 %v991
        %v1116 = vpop.f32.mrf.mxu0
        %v1117 = vadd.f32 %v1014, %v1116
        %v1118 = vpop.f32.mrf.mxu0
        %1119 = vmatprep.mubr.f32.mxu0 0.0
        %1120 = vmatmul.mubr.f32.gmra.mxu0 %v992
        %v1121 = vpop.f32.mrf.mxu0
        %v1122 = vadd.f32 %v1014, %v1121
        %v1123 = vpop.f32.mrf.mxu0
        %1124 = vdwg.mxu0
        %v1125 = vadd.f32 %v831, %v1082
        %v1126 = vadd.f32 %v832, %v1087
        %v1127 = vadd.f32 %v833, %v1092
        %v1128 = vadd.f32 %v834, %v1097
        %v1129 = vadd.f32 %v835, %v1102
        %v1130 = vadd.f32 %v836, %v1107
        %v1131 = vadd.f32 %v837, %v1112
        %v1132 = vadd.f32 %v838, %v1117
        %v1133 = vadd.f32 %v839, %v1122
        %v1134 = vmax.f32 %v1125, 0.0
        %v1135 = vmax.f32 %v1126, 0.0
        %v1136 = vmax.f32 %v1127, 0.0
        %v1137 = vmax.f32 %v1128, 0.0
        %v1138 = vmax.f32 %v1129, 0.0
        %v1139 = vmax.f32 %v1130, 0.0
        %v1140 = vmax.f32 %v1131, 0.0
        %v1141 = vmax.f32 %v1132, 0.0
        %v1142 = vmax.f32 %v1133, 0.0
        %s1143 = scalar_lea.vmem [#allocation2], 256
        %v1144 = vld [vmem:[%s1143] sm:$0xff]
        %v1145 = vld [vmem:[%s1143 + $0x8] sm:$0xff]
        %v1146 = vld [vmem:[%s1143 + $0x10] sm:$0xff]
        %v1147 = vld [vmem:[%s1143 + $0x18] sm:$0xff]
        %v1148 = vld [vmem:[%s1143 + $0x20] sm:$0xff]
        %v1149 = vld [vmem:[%s1143 + $0x28] sm:$0xff]
        %v1150 = vld [vmem:[%s1143 + $0x30] sm:$0xff]
        %v1151 = vld [vmem:[%s1143 + $0x38] sm:$0xff]
        %v1152 = vld [vmem:[%s1143 + $0x40] sm:$0xff]
        %v1153 = vld [vmem:[%s1143 + $0x48] sm:$0xff]
        %v1154 = vld [vmem:[%s1143 + $0x50] sm:$0xff]
        %v1155 = vld [vmem:[%s1143 + $0x58] sm:$0xff]
        %v1156 = vld [vmem:[%s1143 + $0x60] sm:$0xff]
        %v1157 = vld [vmem:[%s1143 + $0x68] sm:$0xff]
        %v1158 = vld [vmem:[%s1143 + $0x70] sm:$0xff]
        %v1159 = vld [vmem:[%s1143 + $0x78] sm:$0xff]
        %s1160 = scalar_lea.vmem %s4, 2
        %v1161 = vld [vmem:[%s1160] sm:$0x1]
        %v1163 = vlaneseq
        %v1164 = vshrl.u32 %v1163, 7
        %v1165 = vsub.s32 0, %v1164
        %v1166 = vrot.slane %v1161, %v1165
        %1168 = vmatprep.subr.mxu0 0.0
        %1169 = vmatpush1.msra.mxu0 %v1159
        %1170 = vmatprep.subr.mxu0 0.0
        %1171 = vmatpush1.msra.mxu0 %v1158
        %1172 = vmatprep.subr.mxu0 0.0
        %1173 = vmatpush1.msra.mxu0 %v1157
        %1174 = vmatprep.subr.mxu0 0.0
        %1175 = vmatpush1.msra.mxu0 %v1156
        %1176 = vmatprep.subr.mxu0 0.0
        %1177 = vmatpush1.msra.mxu0 %v1155
        %1178 = vmatprep.subr.mxu0 0.0
        %1179 = vmatpush1.msra.mxu0 %v1154
        %1180 = vmatprep.subr.mxu0 0.0
        %1181 = vmatpush1.msra.mxu0 %v1153
        %1182 = vmatprep.subr.mxu0 0.0
        %1183 = vmatpush1.msra.mxu0 %v1152
        %1184 = vmatprep.subr.mxu0 0.0
        %1185 = vmatpush1.msra.mxu0 %v1151
        %1186 = vmatprep.subr.mxu0 0.0
        %1187 = vmatpush1.msra.mxu0 %v1150
        %1188 = vmatprep.subr.mxu0 0.0
        %1189 = vmatpush1.msra.mxu0 %v1149
        %1190 = vmatprep.subr.mxu0 0.0
        %1191 = vmatpush1.msra.mxu0 %v1148
        %1192 = vmatprep.subr.mxu0 0.0
        %1193 = vmatpush1.msra.mxu0 %v1147
        %1194 = vmatprep.subr.mxu0 0.0
        %1195 = vmatpush1.msra.mxu0 %v1146
        %1196 = vmatprep.subr.mxu0 0.0
        %1197 = vmatpush1.msra.mxu0 %v1145
        %1198 = vmatprep.subr.mxu0 0.0
        %1199 = vmatpush1.msra.mxu0 %v1144
        %1200 = vmatprep.subr.mxu0 0.0
        %1201 = vmatpush2.msra.mxu0 0.0
        %1202 = vmatprep.subr.mxu0 0.0
        %1203 = vmatpush2.msra.mxu0 0.0
        %1204 = vmatprep.subr.mxu0 0.0
        %1205 = vmatpush2.msra.mxu0 0.0
        %1206 = vmatprep.subr.mxu0 0.0
        %1207 = vmatpush2.msra.mxu0 0.0
        %1208 = vmatprep.subr.mxu0 0.0
        %1209 = vmatpush2.msra.mxu0 0.0
        %1210 = vmatprep.subr.mxu0 0.0
        %1211 = vmatpush2.msra.mxu0 0.0
        %1212 = vmatprep.subr.mxu0 0.0
        %1213 = vmatpush2.msra.mxu0 0.0
        %1214 = vmatprep.subr.mxu0 0.0
        %1215 = vmatpush2.msra.mxu0 0.0
        %1216 = vmatprep.subr.mxu0 0.0
        %1217 = vmatpush2.msra.mxu0 0.0
        %1218 = vmatprep.subr.mxu0 0.0
        %1219 = vmatpush2.msra.mxu0 0.0
        %1220 = vmatprep.subr.mxu0 0.0
        %1221 = vmatpush2.msra.mxu0 0.0
        %1222 = vmatprep.subr.mxu0 0.0
        %1223 = vmatpush2.msra.mxu0 0.0
        %1224 = vmatprep.subr.mxu0 0.0
        %1225 = vmatpush2.msra.mxu0 0.0
        %1226 = vmatprep.subr.mxu0 0.0
        %1227 = vmatpush2.msra.mxu0 0.0
        %1228 = vmatprep.subr.mxu0 0.0
        %1229 = vmatpush2.msra.mxu0 0.0
        %1230 = vmatprep.subr.mxu0 0.0
        %1231 = vmatpush2.msra.mxu0 0.0
        %1232 = vmatprep.mubr.f32.mxu0 0.0
        %1233 = vmatmul.mubr.f32.gmra.mxu0 %v1134
        %v1234 = vpop.f32.mrf.mxu0
        %v1235 = vadd.f32 %v1166, %v1234
        %v1236 = vpop.f32.mrf.mxu0
        %1237 = vmatprep.mubr.f32.mxu0 0.0
        %1238 = vmatmul.mubr.f32.gmra.mxu0 %v1135
        %v1239 = vpop.f32.mrf.mxu0
        %v1240 = vadd.f32 %v1166, %v1239
        %v1241 = vpop.f32.mrf.mxu0
        %1242 = vmatprep.mubr.f32.mxu0 0.0
        %1243 = vmatmul.mubr.f32.gmra.mxu0 %v1136
        %v1244 = vpop.f32.mrf.mxu0
        %v1245 = vadd.f32 %v1166, %v1244
        %v1246 = vpop.f32.mrf.mxu0
        %1247 = vmatprep.mubr.f32.mxu0 0.0
        %1248 = vmatmul.mubr.f32.gmra.mxu0 %v1137
        %v1249 = vpop.f32.mrf.mxu0
        %v1250 = vadd.f32 %v1166, %v1249
        %v1251 = vpop.f32.mrf.mxu0
        %1252 = vmatprep.mubr.f32.mxu0 0.0
        %1253 = vmatmul.mubr.f32.gmra.mxu0 %v1138
        %v1254 = vpop.f32.mrf.mxu0
        %v1255 = vadd.f32 %v1166, %v1254
        %v1256 = vpop.f32.mrf.mxu0
        %1257 = vmatprep.mubr.f32.mxu0 0.0
        %1258 = vmatmul.mubr.f32.gmra.mxu0 %v1139
        %v1259 = vpop.f32.mrf.mxu0
        %v1260 = vadd.f32 %v1166, %v1259
        %v1261 = vpop.f32.mrf.mxu0
        %1262 = vmatprep.mubr.f32.mxu0 0.0
        %1263 = vmatmul.mubr.f32.gmra.mxu0 %v1140
        %v1264 = vpop.f32.mrf.mxu0
        %v1265 = vadd.f32 %v1166, %v1264
        %v1266 = vpop.f32.mrf.mxu0
        %1267 = vmatprep.mubr.f32.mxu0 0.0
        %1268 = vmatmul.mubr.f32.gmra.mxu0 %v1141
        %v1269 = vpop.f32.mrf.mxu0
        %v1270 = vadd.f32 %v1166, %v1269
        %v1271 = vpop.f32.mrf.mxu0
        %1272 = vmatprep.mubr.f32.mxu0 0.0
        %1273 = vmatmul.mubr.f32.gmra.mxu0 %v1142
        %v1274 = vpop.f32.mrf.mxu0
        %v1275 = vadd.f32 %v1166, %v1274
        %v1276 = vpop.f32.mrf.mxu0
        %1277 = vdwg.mxu0
        %v1278 = vmax.f32 %v1235, 0.0
        %v1279 = vmax.f32 %v1240, 0.0
        %v1280 = vmax.f32 %v1245, 0.0
        %v1281 = vmax.f32 %v1250, 0.0
        %v1282 = vmax.f32 %v1255, 0.0
        %v1283 = vmax.f32 %v1260, 0.0
        %v1284 = vmax.f32 %v1265, 0.0
        %v1285 = vmax.f32 %v1270, 0.0
        %v1286 = vmax.f32 %v1275, 0.0
        %s1287 = scalar_lea.vmem [#allocation4], 256
        %v1288 = vld [vmem:[%s1287] sm:$0xff]
        %v1289 = vld [vmem:[%s1287 + $0x8] sm:$0xff]
        %v1290 = vld [vmem:[%s1287 + $0x10] sm:$0xff]
        %v1291 = vld [vmem:[%s1287 + $0x18] sm:$0xff]
        %v1292 = vld [vmem:[%s1287 + $0x20] sm:$0xff]
        %v1293 = vld [vmem:[%s1287 + $0x28] sm:$0xff]
        %v1294 = vld [vmem:[%s1287 + $0x30] sm:$0xff]
        %v1295 = vld [vmem:[%s1287 + $0x38] sm:$0xff]
        %v1296 = vld [vmem:[%s1287 + $0x40] sm:$0xff]
        %v1297 = vld [vmem:[%s1287 + $0x48] sm:$0xff]
        %v1298 = vld [vmem:[%s1287 + $0x50] sm:$0xff]
        %v1299 = vld [vmem:[%s1287 + $0x58] sm:$0xff]
        %v1300 = vld [vmem:[%s1287 + $0x60] sm:$0xff]
        %v1301 = vld [vmem:[%s1287 + $0x68] sm:$0xff]
        %v1302 = vld [vmem:[%s1287 + $0x70] sm:$0xff]
        %v1303 = vld [vmem:[%s1287 + $0x78] sm:$0xff]
        %v1304 = vld [vmem:[%s381 + $0x3] sm:$0x1]
        %v1305 = vlaneseq
        %v1306 = vshrl.u32 %v1305, 7
        %v1307 = vsub.s32 0, %v1306
        %v1308 = vrot.slane %v1304, %v1307
        %1309 = vmatprep.subr.mxu0 0.0
        %1310 = vmatpush1.msra.mxu0 %v1303
        %1311 = vmatprep.subr.mxu0 0.0
        %1312 = vmatpush1.msra.mxu0 %v1302
        %1313 = vmatprep.subr.mxu0 0.0
        %1314 = vmatpush1.msra.mxu0 %v1301
        %1315 = vmatprep.subr.mxu0 0.0
        %1316 = vmatpush1.msra.mxu0 %v1300
        %1317 = vmatprep.subr.mxu0 0.0
        %1318 = vmatpush1.msra.mxu0 %v1299
        %1319 = vmatprep.subr.mxu0 0.0
        %1320 = vmatpush1.msra.mxu0 %v1298
        %1321 = vmatprep.subr.mxu0 0.0
        %1322 = vmatpush1.msra.mxu0 %v1297
        %1323 = vmatprep.subr.mxu0 0.0
        %1324 = vmatpush1.msra.mxu0 %v1296
        %1325 = vmatprep.subr.mxu0 0.0
        %1326 = vmatpush1.msra.mxu0 %v1295
        %1327 = vmatprep.subr.mxu0 0.0
        %1328 = vmatpush1.msra.mxu0 %v1294
        %1329 = vmatprep.subr.mxu0 0.0
        %1330 = vmatpush1.msra.mxu0 %v1293
        %1331 = vmatprep.subr.mxu0 0.0
        %1332 = vmatpush1.msra.mxu0 %v1292
        %1333 = vmatprep.subr.mxu0 0.0
        %1334 = vmatpush1.msra.mxu0 %v1291
        %1335 = vmatprep.subr.mxu0 0.0
        %1336 = vmatpush1.msra.mxu0 %v1290
        %1337 = vmatprep.subr.mxu0 0.0
        %1338 = vmatpush1.msra.mxu0 %v1289
        %1339 = vmatprep.subr.mxu0 0.0
        %1340 = vmatpush1.msra.mxu0 %v1288
        %1341 = vmatprep.subr.mxu0 0.0
        %1342 = vmatpush2.msra.mxu0 0.0
        %1343 = vmatprep.subr.mxu0 0.0
        %1344 = vmatpush2.msra.mxu0 0.0
        %1345 = vmatprep.subr.mxu0 0.0
        %1346 = vmatpush2.msra.mxu0 0.0
        %1347 = vmatprep.subr.mxu0 0.0
        %1348 = vmatpush2.msra.mxu0 0.0
        %1349 = vmatprep.subr.mxu0 0.0
        %1350 = vmatpush2.msra.mxu0 0.0
        %1351 = vmatprep.subr.mxu0 0.0
        %1352 = vmatpush2.msra.mxu0 0.0
        %1353 = vmatprep.subr.mxu0 0.0
        %1354 = vmatpush2.msra.mxu0 0.0
        %1355 = vmatprep.subr.mxu0 0.0
        %1356 = vmatpush2.msra.mxu0 0.0
        %1357 = vmatprep.subr.mxu0 0.0
        %1358 = vmatpush2.msra.mxu0 0.0
        %1359 = vmatprep.subr.mxu0 0.0
        %1360 = vmatpush2.msra.mxu0 0.0
        %1361 = vmatprep.subr.mxu0 0.0
        %1362 = vmatpush2.msra.mxu0 0.0
        %1363 = vmatprep.subr.mxu0 0.0
        %1364 = vmatpush2.msra.mxu0 0.0
        %1365 = vmatprep.subr.mxu0 0.0
        %1366 = vmatpush2.msra.mxu0 0.0
        %1367 = vmatprep.subr.mxu0 0.0
        %1368 = vmatpush2.msra.mxu0 0.0
        %1369 = vmatprep.subr.mxu0 0.0
        %1370 = vmatpush2.msra.mxu0 0.0
        %1371 = vmatprep.subr.mxu0 0.0
        %1372 = vmatpush2.msra.mxu0 0.0
        %1373 = vmatprep.mubr.f32.mxu0 0.0
        %1374 = vmatmul.mubr.f32.gmra.mxu0 %v1278
        %v1375 = vpop.f32.mrf.mxu0
        %v1376 = vadd.f32 %v1308, %v1375
        %v1377 = vpop.f32.mrf.mxu0
        %1378 = vmatprep.mubr.f32.mxu0 0.0
        %1379 = vmatmul.mubr.f32.gmra.mxu0 %v1279
        %v1380 = vpop.f32.mrf.mxu0
        %v1381 = vadd.f32 %v1308, %v1380
        %v1382 = vpop.f32.mrf.mxu0
        %1383 = vmatprep.mubr.f32.mxu0 0.0
        %1384 = vmatmul.mubr.f32.gmra.mxu0 %v1280
        %v1385 = vpop.f32.mrf.mxu0
        %v1386 = vadd.f32 %v1308, %v1385
        %v1387 = vpop.f32.mrf.mxu0
        %1388 = vmatprep.mubr.f32.mxu0 0.0
        %1389 = vmatmul.mubr.f32.gmra.mxu0 %v1281
        %v1390 = vpop.f32.mrf.mxu0
        %v1391 = vadd.f32 %v1308, %v1390
        %v1392 = vpop.f32.mrf.mxu0
        %1393 = vmatprep.mubr.f32.mxu0 0.0
        %1394 = vmatmul.mubr.f32.gmra.mxu0 %v1282
        %v1395 = vpop.f32.mrf.mxu0
        %v1396 = vadd.f32 %v1308, %v1395
        %v1397 = vpop.f32.mrf.mxu0
        %1398 = vmatprep.mubr.f32.mxu0 0.0
        %1399 = vmatmul.mubr.f32.gmra.mxu0 %v1283
        %v1400 = vpop.f32.mrf.mxu0
        %v1401 = vadd.f32 %v1308, %v1400
        %v1402 = vpop.f32.mrf.mxu0
        %1403 = vmatprep.mubr.f32.mxu0 0.0
        %1404 = vmatmul.mubr.f32.gmra.mxu0 %v1284
        %v1405 = vpop.f32.mrf.mxu0
        %v1406 = vadd.f32 %v1308, %v1405
        %v1407 = vpop.f32.mrf.mxu0
        %1408 = vmatprep.mubr.f32.mxu0 0.0
        %1409 = vmatmul.mubr.f32.gmra.mxu0 %v1285
        %v1410 = vpop.f32.mrf.mxu0
        %v1411 = vadd.f32 %v1308, %v1410
        %v1412 = vpop.f32.mrf.mxu0
        %1413 = vmatprep.mubr.f32.mxu0 0.0
        %1414 = vmatmul.mubr.f32.gmra.mxu0 %v1286
        %v1415 = vpop.f32.mrf.mxu0
        %v1416 = vadd.f32 %v1308, %v1415
        %v1417 = vpop.f32.mrf.mxu0
        %1418 = vdwg.mxu0
        %v1419 = vadd.f32 %v1125, %v1376
        %v1420 = vadd.f32 %v1126, %v1381
        %v1421 = vadd.f32 %v1127, %v1386
        %v1422 = vadd.f32 %v1128, %v1391
        %v1423 = vadd.f32 %v1129, %v1396
        %v1424 = vadd.f32 %v1130, %v1401
        %v1425 = vadd.f32 %v1131, %v1406
        %v1426 = vadd.f32 %v1132, %v1411
        %v1427 = vadd.f32 %v1133, %v1416
        %v1428 = vmax.f32 %v1419, 0.0
        %v1429 = vmax.f32 %v1420, 0.0
        %v1430 = vmax.f32 %v1421, 0.0
        %v1431 = vmax.f32 %v1422, 0.0
        %v1432 = vmax.f32 %v1423, 0.0
        %v1433 = vmax.f32 %v1424, 0.0
        %v1434 = vmax.f32 %v1425, 0.0
        %v1435 = vmax.f32 %v1426, 0.0
        %v1436 = vmax.f32 %v1427, 0.0
        %v1437 = vld [vmem:[%s6] sm:$0xff]
        %v1438 = vld [vmem:[%s6 + $0x8] sm:$0xff]
        %v1439 = vld [vmem:[%s6 + $0x10] sm:$0xff]
        %v1440 = vld [vmem:[%s6 + $0x18] sm:$0xff]
        %v1441 = vld [vmem:[%s6 + $0x20] sm:$0xff]
        %v1442 = vld [vmem:[%s6 + $0x28] sm:$0xff]
        %v1443 = vld [vmem:[%s6 + $0x30] sm:$0xff]
        %v1444 = vld [vmem:[%s6 + $0x38] sm:$0xff]
        %v1445 = vld [vmem:[%s6 + $0x40] sm:$0xff]
        %v1446 = vld [vmem:[%s6 + $0x48] sm:$0xff]
        %v1447 = vld [vmem:[%s6 + $0x50] sm:$0xff]
        %v1448 = vld [vmem:[%s6 + $0x58] sm:$0xff]
        %v1449 = vld [vmem:[%s6 + $0x60] sm:$0xff]
        %v1450 = vld [vmem:[%s6 + $0x68] sm:$0xff]
        %v1451 = vld [vmem:[%s6 + $0x70] sm:$0xff]
        %v1452 = vld [vmem:[%s6 + $0x78] sm:$0xff]
        %v1453 = vld [vmem:[%s7] sm:$0x1]
        %v1455 = vlaneseq
        %v1456 = vshrl.u32 %v1455, 7
        %v1457 = vsub.s32 0, %v1456
        %v1458 = vrot.slane %v1453, %v1457
        %1460 = vmatprep.subr.mxu0 0.0
        %1461 = vmatpush1.msra.mxu0 %v1452
        %1462 = vmatprep.subr.mxu0 0.0
        %1463 = vmatpush1.msra.mxu0 %v1451
        %1464 = vmatprep.subr.mxu0 0.0
        %1465 = vmatpush1.msra.mxu0 %v1450
        %1466 = vmatprep.subr.mxu0 0.0
        %1467 = vmatpush1.msra.mxu0 %v1449
        %1468 = vmatprep.subr.mxu0 0.0
        %1469 = vmatpush1.msra.mxu0 %v1448
        %1470 = vmatprep.subr.mxu0 0.0
        %1471 = vmatpush1.msra.mxu0 %v1447
        %1472 = vmatprep.subr.mxu0 0.0
        %1473 = vmatpush1.msra.mxu0 %v1446
        %1474 = vmatprep.subr.mxu0 0.0
        %1475 = vmatpush1.msra.mxu0 %v1445
        %1476 = vmatprep.subr.mxu0 0.0
        %1477 = vmatpush1.msra.mxu0 %v1444
        %1478 = vmatprep.subr.mxu0 0.0
        %1479 = vmatpush1.msra.mxu0 %v1443
        %1480 = vmatprep.subr.mxu0 0.0
        %1481 = vmatpush1.msra.mxu0 %v1442
        %1482 = vmatprep.subr.mxu0 0.0
        %1483 = vmatpush1.msra.mxu0 %v1441
        %1484 = vmatprep.subr.mxu0 0.0
        %1485 = vmatpush1.msra.mxu0 %v1440
        %1486 = vmatprep.subr.mxu0 0.0
        %1487 = vmatpush1.msra.mxu0 %v1439
        %1488 = vmatprep.subr.mxu0 0.0
        %1489 = vmatpush1.msra.mxu0 %v1438
        %1490 = vmatprep.subr.mxu0 0.0
        %1491 = vmatpush1.msra.mxu0 %v1437
        %1492 = vmatprep.subr.mxu0 0.0
        %1493 = vmatpush2.msra.mxu0 0.0
        %1494 = vmatprep.subr.mxu0 0.0
        %1495 = vmatpush2.msra.mxu0 0.0
        %1496 = vmatprep.subr.mxu0 0.0
        %1497 = vmatpush2.msra.mxu0 0.0
        %1498 = vmatprep.subr.mxu0 0.0
        %1499 = vmatpush2.msra.mxu0 0.0
        %1500 = vmatprep.subr.mxu0 0.0
        %1501 = vmatpush2.msra.mxu0 0.0
        %1502 = vmatprep.subr.mxu0 0.0
        %1503 = vmatpush2.msra.mxu0 0.0
        %1504 = vmatprep.subr.mxu0 0.0
        %1505 = vmatpush2.msra.mxu0 0.0
        %1506 = vmatprep.subr.mxu0 0.0
        %1507 = vmatpush2.msra.mxu0 0.0
        %1508 = vmatprep.subr.mxu0 0.0
        %1509 = vmatpush2.msra.mxu0 0.0
        %1510 = vmatprep.subr.mxu0 0.0
        %1511 = vmatpush2.msra.mxu0 0.0
        %1512 = vmatprep.subr.mxu0 0.0
        %1513 = vmatpush2.msra.mxu0 0.0
        %1514 = vmatprep.subr.mxu0 0.0
        %1515 = vmatpush2.msra.mxu0 0.0
        %1516 = vmatprep.subr.mxu0 0.0
        %1517 = vmatpush2.msra.mxu0 0.0
        %1518 = vmatprep.subr.mxu0 0.0
        %1519 = vmatpush2.msra.mxu0 0.0
        %1520 = vmatprep.subr.mxu0 0.0
        %1521 = vmatpush2.msra.mxu0 0.0
        %1522 = vmatprep.subr.mxu0 0.0
        %1523 = vmatpush2.msra.mxu0 0.0
        %1524 = vmatprep.mubr.f32.mxu0 0.0
        %1525 = vmatmul.mubr.f32.gmra.mxu0 %v1428
        %v1526 = vpop.f32.mrf.mxu0
        %v1527 = vadd.f32 %v1458, %v1526
        %v1528 = vpop.f32.mrf.mxu0
        %1529 = vmatprep.mubr.f32.mxu0 0.0
        %1530 = vmatmul.mubr.f32.gmra.mxu0 %v1429
        %v1531 = vpop.f32.mrf.mxu0
        %v1532 = vadd.f32 %v1458, %v1531
        %v1533 = vpop.f32.mrf.mxu0
        %1534 = vmatprep.mubr.f32.mxu0 0.0
        %1535 = vmatmul.mubr.f32.gmra.mxu0 %v1430
        %v1536 = vpop.f32.mrf.mxu0
        %v1537 = vadd.f32 %v1458, %v1536
        %v1538 = vpop.f32.mrf.mxu0
        %1539 = vmatprep.mubr.f32.mxu0 0.0
        %1540 = vmatmul.mubr.f32.gmra.mxu0 %v1431
        %v1541 = vpop.f32.mrf.mxu0
        %v1542 = vadd.f32 %v1458, %v1541
        %v1543 = vpop.f32.mrf.mxu0
        %1544 = vmatprep.mubr.f32.mxu0 0.0
        %1545 = vmatmul.mubr.f32.gmra.mxu0 %v1432
        %v1546 = vpop.f32.mrf.mxu0
        %v1547 = vadd.f32 %v1458, %v1546
        %v1548 = vpop.f32.mrf.mxu0
        %1549 = vmatprep.mubr.f32.mxu0 0.0
        %1550 = vmatmul.mubr.f32.gmra.mxu0 %v1433
        %v1551 = vpop.f32.mrf.mxu0
        %v1552 = vadd.f32 %v1458, %v1551
        %v1553 = vpop.f32.mrf.mxu0
        %1554 = vmatprep.mubr.f32.mxu0 0.0
        %1555 = vmatmul.mubr.f32.gmra.mxu0 %v1434
        %v1556 = vpop.f32.mrf.mxu0
        %v1557 = vadd.f32 %v1458, %v1556
        %v1558 = vpop.f32.mrf.mxu0
        %1559 = vmatprep.mubr.f32.mxu0 0.0
        %1560 = vmatmul.mubr.f32.gmra.mxu0 %v1435
        %v1561 = vpop.f32.mrf.mxu0
        %v1562 = vadd.f32 %v1458, %v1561
        %v1563 = vpop.f32.mrf.mxu0
        %1564 = vmatprep.mubr.f32.mxu0 0.0
        %1565 = vmatmul.mubr.f32.gmra.mxu0 %v1436
        %v1566 = vpop.f32.mrf.mxu0
        %v1567 = vadd.f32 %v1458, %v1566
        %v1568 = vpop.f32.mrf.mxu0
        %1569 = vdwg.mxu0
        %1570 = vst.msk [vmem:[%s390] sm:$0xff] %vm407, %v1527
        %1571 = vst.msk [vmem:[%s390 + $0x8] sm:$0xff] %vm407, %v1532
        %1572 = vst.msk [vmem:[%s390 + $0x10] sm:$0xff] %vm407, %v1537
        %1573 = vst.msk [vmem:[%s390 + $0x18] sm:$0xff] %vm407, %v1542
        %1574 = vst.msk [vmem:[%s390 + $0x20] sm:$0xff] %vm407, %v1547
        %1575 = vst.msk [vmem:[%s390 + $0x28] sm:$0xff] %vm407, %v1552
        %1576 = vst.msk [vmem:[%s390 + $0x30] sm:$0xff] %vm407, %v1557
        %1577 = vst.msk [vmem:[%s390 + $0x38] sm:$0xff] %vm407, %v1562
        %1578 = vst.msk [vmem:[%s390 + $0x40] sm:$0xff] %vm407, %v1567
        %s1579 = smul.u32 9, %s26
        %p1580 = scmp.lt.s32.totalorder %s25, 1
        %s1581 = scalar_select %p1580, %s25, 1
        %p1582 = scmp.lt.s32.totalorder %s1579, 8
        %s1583 = scalar_select %p1582, %s1579, 8
        %s1584 = smul.addr %s1581, 9
        %s1585 = sadd.s32 %s1583, %s1584
        %s1586 = smul.addr %s1585, 8
        %s1587 = scalar_lea.vmem %s8, %s1586
        // Predicated region
        $region61: #{tpu_custom_call.1} parent=51 // pred_check
          %p1588 = pneg %p233
        $region62: #{tpu_custom_call.1} parent=51 // pred_check_branch
          %1590 = sbr.rel (%p1588) target = $region64
        $region63: #{tpu_custom_call.1} parent=51 // pred_region
          %s1591 = smul.u32 9, %s26
        $region64: #{tpu_custom_call.1} parent=51 // pred_fallthru
          _
      $region52: #{tpu_custom_call.1} parent=5 // pred_fallthru
        _
      %p1592 = scmp.le.s32.totalorder 2, %s16
      // Predicated region
      $region65: #{tpu_custom_call.1} parent=5 // pred_check
        %p1593 = pneg %p1592
      $region66: #{tpu_custom_call.1} parent=5 // pred_check_branch
        %1595 = sbr.rel (%p1593) target = $region68
      $region67: #{tpu_custom_call.1} parent=5 // pred_region
        %s1596 = ssub.s32 %s16, 2
        // Predicated region
        $region69: #{tpu_custom_call.1} parent=67 // pred_check
          %p1597 = pneg %p239
        $region70: #{tpu_custom_call.1} parent=67 // pred_check_branch
          %1599 = sbr.rel (%p1597) target = $region72
        $region71: #{tpu_custom_call.1} parent=67 // pred_region
          %s1600 = smul.u32 9, %s28
          %p1601 = scmp.lt.s32.totalorder %s27, 1
          %s1602 = scalar_select %p1601, %s27, 1
          %p1603 = scmp.lt.s32.totalorder %s1600, 8
          %s1604 = scalar_select %p1603, %s1600, 8
          %s1605 = smul.addr %s1602, 9
          %s1606 = sadd.s32 %s1604, %s1605
          %s1607 = smul.addr %s1606, 8
          %s1608 = scalar_lea.vmem %s8, %s1607
        $region72: #{tpu_custom_call.1} parent=67 // pred_fallthru
          _
      $region68: #{tpu_custom_call.1} parent=5 // pred_fallthru
        _
    $region6: #{tpu_custom_call.1} parent=1 // loop_footer
      %s20 = sadd.s32 1, %s16
    $region7: #{tpu_custom_call.1} parent=1 // loop_footer_branch
      %15 = sbr.rel target = $region3
    $region8: #{tpu_custom_call.1} parent=1 // loop_exit
      _
    %1609 = vsyncpa [#allocation3], 1
    %s1610 = scalar_lea.sflag [#allocation3], 1
    %1611 = vsyncpa %s1610, 1
    %1612 = vsyncpa [#allocation5], 1

</llo_original>
